<compile_context>
chip_gen: v5e
topology: v5e:2x2
jax: 0.10.0
libtpu: 0.0.40
codegen_flags: <defaults>
</compile_context>

<pallas_src>
import functools

import jax
import jax.numpy as jnp
from jax import lax
from jax.experimental import pallas as pl
from jax.experimental.pallas import tpu as pltpu

# ---- hyperparameters (mirror opt.*) ----
QUEUE_SIZE = 16
MOMENTUM = 0.999
TEMPERATURE = 0.05
LABEL_SMOOTHING = 0.1
BETA = 0.3
ALPHA = 0.95
NORM_QUERY = True
NORM_DOC = True
PROJECTION_SIZE = 32       # D
VOCAB = 64
SEQ = 8
BSZ = 4
KEYS_PAD = 128             # lane-dense width of the contrastive score tile

# lane layout of the packed (1, 128) stats output
_S_LOSS, _S_ELOSS, _S_RANK, _S_KL, _S_ACC, _S_STDQ, _S_STDP, _S_STDWP = range(8)


# ---------------------------------------------------------------------------
# in-kernel helpers
# ---------------------------------------------------------------------------
def _log_softmax(x):
    m = jnp.max(x, axis=-1, keepdims=True)
    z = x - m
    return z - jnp.log(jnp.sum(jnp.exp(z), axis=-1, keepdims=True))


def _softplus(x):
    # numerically stable softplus; note -logsigmoid(x) == softplus(-x)
    return jnp.maximum(x, 0.0) + jnp.log(1.0 + jnp.exp(-jnp.abs(x)))


def _std_over_batch_mean(x, n_rows):
    # torch.std(x, dim=0) (unbiased, ddof=1) then .mean() -> (1, 1)
    mu = jnp.sum(x, axis=0, keepdims=True) / n_rows
    var = jnp.sum((x - mu) * (x - mu), axis=0, keepdims=True) / (n_rows - 1)
    return jnp.sum(jnp.sqrt(var), axis=-1, keepdims=True) / x.shape[-1]


# ---------------------------------------------------------------------------
# fused forward kernel:
#   momentum EMA + encode(q,p,wp) x {encoder_q, encoder_k} + all losses
#   + in-place queue enqueue
# ---------------------------------------------------------------------------
def _fused_kernel(q_tok_ref, p_tok_ref, wp_tok_ref,
                  q_mask_ref, p_mask_ref, wp_mask_ref,
                  emb_cat_ref, w_blk_ref, queue_ref, ptr_ref,
                  queue_out_ref, emb_cat_out_ref, w_blk_out_ref, stats_ref,
                  keys_pad_ref, *,
                  bsz, vocab, dproj, temperature, label_smoothing, beta, alpha,
                  norm_query, norm_doc, momentum, do_momentum):
    f32 = jnp.float32
    bf16 = jnp.bfloat16
    B = bsz
    D = dproj
    NB = 3 * B                                   # rows: [0:B)=q, [B:2B)=p, [2B:3B)=wp
    V = vocab

    # --- stacked token / mask views (in-kernel, inputs arrive un-concatenated)
    tok_all = jnp.concatenate(
        [q_tok_ref[...], p_tok_ref[...], wp_tok_ref[...]], axis=0)       # (3B, L)
    mask_all = jnp.concatenate(
        [q_mask_ref[...], p_mask_ref[...], wp_mask_ref[...]],
        axis=0).astype(f32)                                              # (3B, L)
    L = tok_all.shape[1]

    # --- synthetic encoder front-end: vectorized masked one-hot token counts
    # TODO(synk): the real module runs a full HuggingFace Contriever/BERT; here
    # the encoder is embedding + masked-mean-pool + projection (+ L2 norm).
    iota_v = lax.broadcasted_iota(jnp.int32, (NB, L, V), 2)
    onehot = jnp.where(tok_all[:, :, None] == iota_v, mask_all[:, :, None], 0.0)
    counts = jnp.sum(onehot, axis=1)                                     # (3B, V)
    denom = jnp.maximum(jnp.sum(mask_all, axis=1, keepdims=True), 1e-6)  # (3B, 1)
    inv_denom = 1.0 / denom

    # --- momentum (EMA) update of the key-encoder halves, done in-kernel
    emb_cat = emb_cat_ref[...]                   # (V, 2D)  [q half | k half]
    w_blk = w_blk_ref[...]                       # (2D, 2D) blockdiag(w_q, w_k)
    if do_momentum:
        m = momentum
        e_q = emb_cat[:, :D]
        emb_cat = jnp.concatenate(
            [e_q, m * emb_cat[:, D:] + (1.0 - m) * e_q], axis=1)
        w_q = w_blk[:D, :D]
        w_k = m * w_blk[D:, D:] + (1.0 - m) * w_q
        zd = jnp.zeros((D, D), f32)
        w_blk = jnp.concatenate(
            [jnp.concatenate([w_q, zd], axis=1),
             jnp.concatenate([zd, w_k], axis=1)], axis=0)
    emb_cat_out_ref[...] = emb_cat
    w_blk_out_ref[...] = w_blk

    # --- merged encoders: 2 MXU matmuls cover both q- and k-encoder paths
    pooled = jnp.dot(counts.astype(bf16), emb_cat.astype(bf16),
                     preferred_element_type=f32) * inv_denom             # (3B, 2D)
    proj = jnp.dot(pooled.astype(bf16), w_blk.astype(bf16),
                   preferred_element_type=f32)                           # (3B, 2D)

    # --- per-half L2 normalisation (left half = encoder_q, right = encoder_k)
    col2 = lax.broadcasted_iota(jnp.int32, (NB, 2 * D), 1)
    in_q_half = col2 < D
    sq = proj * proj
    inv_nq = lax.rsqrt(
        jnp.sum(jnp.where(in_q_half, sq, 0.0), axis=-1, keepdims=True) + 1e-12)
    inv_nk = lax.rsqrt(
        jnp.sum(jnp.where(in_q_half, 0.0, sq), axis=-1, keepdims=True) + 1e-12)
    scale = jnp.where(in_q_half, inv_nq, inv_nk)
    if norm_query and norm_doc:
        proj = proj * scale
    elif norm_query or norm_doc:
        rowid = lax.broadcasted_iota(jnp.int32, (NB, 1), 0)
        sel = (rowid < B) if norm_query else (rowid >= B)
        proj = jnp.where(sel, proj * scale, proj)

    proj_q = proj[:, :D]                         # query-encoder outputs (3B, D)
    proj_k = proj[:, D:]                         # key-encoder outputs   (3B, D)
    q_q, q_p, q_wp = proj_q[0:B], proj_q[B:2 * B], proj_q[2 * B:3 * B]
    k_q, k_p, k_wp = proj_k[0:B], proj_k[B:2 * B], proj_k[2 * B:3 * B]
    k_keys = proj_k[B:3 * B]                     # [k_p ; k_wp]  (2B, D)

    inv_b = 1.0 / B

    # --- KL(softmax(k_p) || log_softmax(q_q)), reduction='batchmean'
    lq = _log_softmax(q_q)
    lt = _log_softmax(k_p)
    t = jnp.exp(lt)
    kl_loss = jnp.sum(jnp.sum(t * (lt - lq), axis=-1, keepdims=True),
                      axis=0, keepdims=True) * inv_b                     # (1,1)

    # --- DPO-style rank loss (one softplus; softplus(-x) = softplus(x) - x)
    inv_t = 1.0 / temperature
    q_al = jnp.sum(q_q * q_p, axis=-1, keepdims=True) * inv_t
    q_un = jnp.sum(q_q * q_wp, axis=-1, keepdims=True) * inv_t
    k_al = jnp.sum(k_q * k_p, axis=-1, keepdims=True) * inv_t
    k_un = jnp.sum(k_q * k_wp, axis=-1, keepdims=True) * inv_t
    bl = beta * ((q_al - q_un) - (k_al - k_un))                          # (B,1)
    rank_rows = _softplus(bl) - (1.0 - label_smoothing) * bl
    rank_loss = jnp.sum(rank_rows, axis=0, keepdims=True) * inv_b        # (1,1)

    # --- contrastive label-smoothed CE on ONE lane-dense (B, 128) score tile
    #     columns: [l_pos (0..B-1) | l_weak (B..2B-1, diag dropped) | l_neg | pad]
    K = queue_ref.shape[0]
    NPAD = keys_pad_ref.shape[0]                 # 128
    keys_pad_ref[...] = jnp.zeros((NPAD, D), f32)
    keys_pad_ref[0:2 * B, :] = k_keys
    keys_pad_ref[2 * B:2 * B + K, :] = queue_ref[...]
    dn = (((1,), (1,)), ((), ()))
    scores = lax.dot_general(q_q.astype(bf16), keys_pad_ref[...].astype(bf16),
                             dn, preferred_element_type=f32)             # (B, 128)

    row = lax.broadcasted_iota(jnp.int32, (B, NPAD), 0)
    col = lax.broadcasted_iota(jnp.int32, (B, NPAD), 1)
    is_label = col == row                        # diag of the l_pos block
    is_excl = (col == row + B) | (col >= 2 * B + K)   # weak-pos diag + padding
    scores_m = jnp.where(is_excl, -1e30, scores)
    row_max = jnp.max(scores_m, axis=-1, keepdims=True)                  # (B,1)
    z = jnp.sum(jnp.exp(scores_m - row_max), axis=-1, keepdims=True)     # excl -> 0
    lse = row_max + jnp.log(z)
    label_score = jnp.sum(jnp.where(is_label, scores, 0.0),
                          axis=-1, keepdims=True)                        # (B,1)
    n_cls = float(2 * B - 1 + K)
    sum_scores = jnp.sum(jnp.where(is_excl, 0.0, scores),
                         axis=-1, keepdims=True)
    ls = label_smoothing
    ce_rows = ((1.0 - ls) * (lse - label_score)
               + ls * ((n_cls * lse - sum_scores) / n_cls))              # (B,1)
    e_loss = jnp.sum(ce_rows, axis=0, keepdims=True) * inv_b             # (1,1)

    # accuracy: the positive (label) column achieves the row max
    # TODO(synk): torch.argmax tie-breaking may differ on exact ties (negligible).
    correct = (label_score >= row_max).astype(f32)
    accuracy = 100.0 * jnp.sum(correct, axis=0, keepdims=True) * inv_b

    loss = alpha * e_loss + (1.0 - alpha) * rank_loss
    stdq = _std_over_batch_mean(q_q, B)
    stdp = _std_over_batch_mean(q_p, B)
    stdwp = _std_over_batch_mean(q_wp, B)

    # --- in-kernel dequeue/enqueue: old queue + [k_p ; k_wp] rows at ptr
    ptr = pl.multiple_of(ptr_ref[0], 2 * B)
    queue_out_ref[...] = queue_ref[...]
    queue_out_ref[pl.ds(ptr, 2 * B), :] = k_keys

    # --- packed lane-dense stats row (single concatenate, no select chain)
    pad = jnp.zeros((1, stats_ref.shape[1] - 8), f32)
    stats_ref[...] = jnp.concatenate(
        [loss, e_loss, rank_loss, kl_loss, accuracy, stdq, stdp, stdwp, pad],
        axis=1)


def _fused_forward(q_tok, p_tok, wp_tok, q_mask, p_mask, wp_mask,
                   emb_cat, w_blk, queue, queue_ptr, *, do_momentum):
    B, L = q_tok.shape
    V, D2 = emb_cat.shape
    D = D2 // 2
    K = queue.shape[0]
    assert 2 * B + K <= KEYS_PAD

    kern = functools.partial(
        _fused_kernel, bsz=B, vocab=V, dproj=D, temperature=TEMPERATURE,
        label_smoothing=LABEL_SMOOTHING, beta=BETA, alpha=ALPHA,
        norm_query=NORM_QUERY, norm_doc=NORM_DOC,
        momentum=MOMENTUM, do_momentum=do_momentum)

    return pl.pallas_call(
        kern,
        out_shape=(jax.ShapeDtypeStruct((K, D), jnp.float32),     # new queue
                   jax.ShapeDtypeStruct((V, D2), jnp.float32),    # new emb_cat
                   jax.ShapeDtypeStruct((D2, D2), jnp.float32),   # new w_blk
                   jax.ShapeDtypeStruct((1, 128), jnp.float32)),  # stats row
        grid=(1,),
        in_specs=[
            pl.BlockSpec((B, L), lambda i: (0, 0)),               # q tokens
            pl.BlockSpec((B, L), lambda i: (0, 0)),               # p tokens
            pl.BlockSpec((B, L), lambda i: (0, 0)),               # wp tokens
            pl.BlockSpec((B, L), lambda i: (0, 0)),               # q mask
            pl.BlockSpec((B, L), lambda i: (0, 0)),               # p mask
            pl.BlockSpec((B, L), lambda i: (0, 0)),               # wp mask
            pl.BlockSpec((V, D2), lambda i: (0, 0)),              # emb_cat
            pl.BlockSpec((D2, D2), lambda i: (0, 0)),             # w_blk
            pl.BlockSpec((K, D), lambda i: (0, 0)),               # queue (K, D)
            pl.BlockSpec(memory_space=pltpu.MemorySpace.SMEM),    # queue_ptr
        ],
        out_specs=[
            pl.BlockSpec((K, D), lambda i: (0, 0)),
            pl.BlockSpec((V, D2), lambda i: (0, 0)),
            pl.BlockSpec((D2, D2), lambda i: (0, 0)),
            pl.BlockSpec((1, 128), lambda i: (0, 0)),
        ],
        scratch_shapes=[pltpu.VMEM((KEYS_PAD, D), jnp.float32)],  # padded keys
        # in-place state update: queue -> new queue, params -> new params
        input_output_aliases={8: 0, 6: 1, 7: 2},
        compiler_params=pltpu.CompilerParams(
            dimension_semantics=("arbitrary",)),
    )(q_tok, p_tok, wp_tok, q_mask, p_mask, wp_mask,
      emb_cat, w_blk, queue, queue_ptr)


# ---------------------------------------------------------------------------
# Forward (mirrors TimeDPOKLQ.forward); parameters stored pre-merged:
#   emb_cat = [emb_q | emb_k]  (V, 2D),  w_blk = blockdiag(w_q, w_k)  (2D, 2D)
# ---------------------------------------------------------------------------
def time_dpo_klq_forward(params, queue, queue_ptr, q_tokens, q_mask,
                         k_tokens, k_mask, p_tokens, p_mask,
                         wp_tokens, wp_mask, stats_prefix=''):
    del k_tokens, k_mask  # unused by the reference forward as well
    bsz = q_tokens.shape[0]
    enq = 2 * bsz  # [k_p ; k_wp] enqueued, as in the reference
    assert QUEUE_SIZE % enq == 0, f'{enq}, {QUEUE_SIZE}'

    new_queue, new_emb_cat, new_w_blk, stats = _fused_forward(
        q_tokens, p_tokens, wp_tokens, q_mask, p_mask, wp_mask,
        params['emb_cat'], params['w_blk'], queue, queue_ptr,
        do_momentum=(stats_prefix == 'train'))

    loss = stats[0, _S_LOSS]
    new_ptr = jnp.remainder(queue_ptr + enq, QUEUE_SIZE)

    # one host transfer for all logging scalars (mirrors .item() in the
    # reference); in a jitted training step, return `stats` instead.
    # TODO(synk): no dist_utils.gather_nograd (single-device assumed)
    s = jax.device_get(stats)[0]
    prefix = stats_prefix + '/' if len(stats_prefix) > 0 else ''
    iter_stats = {
        f'{prefix}rank_loss': (float(s[_S_RANK]), bsz),
        f'{prefix}e_loss': (float(s[_S_ELOSS]), bsz),
        f'{prefix}kl_loss': (float(s[_S_KL]), bsz),
        f'{prefix}all_loss': (float(s[_S_LOSS]), bsz),
        f'{prefix}accuracy': (float(s[_S_ACC]), bsz),
        f'{prefix}stdq': (float(s[_S_STDQ]), bsz),
        f'{prefix}stdp': (float(s[_S_STDP]), bsz),
        f'{prefix}stdwp': (float(s[_S_STDWP]), bsz),
    }
    new_params = {'emb_cat': new_emb_cat, 'w_blk': new_w_blk}
    return loss, iter_stats, new_queue, new_ptr, new_params


if __name__ == "__main__":
    root = jax.random.PRNGKey(0)
    ks = jax.random.split(root, 12)
    D = PROJECTION_SIZE

    # deterministic synthetic encoder parameters; encoder_k starts as an exact
    # copy of encoder_q (as in __init__).  Stored pre-merged (see header).
    emb_q = 0.02 * jax.random.normal(ks[0], (VOCAB, D), jnp.float32)
    w_q = jax.random.normal(ks[1], (D, D), jnp.float32) / jnp.sqrt(D)
    emb_cat = jnp.concatenate([emb_q, emb_q], axis=1)                 # (V, 2D)
    zD = jnp.zeros((D, D), jnp.float32)
    w_blk = jnp.concatenate([jnp.concatenate([w_q, zD], axis=1),
                             jnp.concatenate([zD, w_q], axis=1)], axis=0)
    params = {'emb_cat': emb_cat, 'w_blk': w_blk}

    # queue buffer: randn(D, K) L2-normalized along dim 0 (as in the module),
    # then stored key-major (K, D) so the kernel can enqueue with a row store.
    queue_dk = jax.random.normal(ks[2], (D, QUEUE_SIZE), jnp.float32)
    queue_dk = queue_dk / jnp.linalg.norm(queue_dk, axis=0, keepdims=True)
    queue = queue_dk.T                                                 # (K, D)
    queue_ptr = jnp.zeros((1,), jnp.int32)

    def make_tokens(k):
        return jax.random.randint(k, (BSZ, SEQ), 0, VOCAB, dtype=jnp.int32)

    def make_mask(k):
        lens = jax.random.randint(k, (BSZ, 1), SEQ // 2, SEQ + 1)
        return (jnp.arange(SEQ)[None, :] < lens).astype(jnp.float32)

    q_tokens = make_tokens(ks[3])
    p_tokens = make_tokens(ks[4])
    wp_tokens = make_tokens(ks[5])
    k_tokens = make_tokens(ks[6])
    q_mask = make_mask(ks[7])
    p_mask = make_mask(ks[8])
    wp_mask = make_mask(ks[9])
    k_mask = make_mask(ks[10])

    loss, iter_stats, new_queue, new_ptr, new_params = time_dpo_klq_forward(
        params, queue, queue_ptr, q_tokens, q_mask, k_tokens, k_mask,
        p_tokens, p_mask, wp_tokens, wp_mask, stats_prefix='train')

    jax.block_until_ready((loss, new_queue, new_ptr,
                           new_params['emb_cat'], new_params['w_blk']))
    print("KERNEL_OK")
</pallas_src>

<mosaic_0001>
module attributes {stable_mosaic.version = 11 : i64} {
  func.func @_fused_kernel(%arg0: i32, %arg1: memref<4x8xi32, #tpu.memory_space<vmem>>, %arg2: memref<4x8xi32, #tpu.memory_space<vmem>>, %arg3: memref<4x8xi32, #tpu.memory_space<vmem>>, %arg4: memref<4x8xf32, #tpu.memory_space<vmem>>, %arg5: memref<4x8xf32, #tpu.memory_space<vmem>>, %arg6: memref<4x8xf32, #tpu.memory_space<vmem>>, %arg7: memref<64x64xf32, #tpu.memory_space<vmem>>, %arg8: memref<64x64xf32, #tpu.memory_space<vmem>>, %arg9: memref<16x32xf32, #tpu.memory_space<vmem>>, %arg10: memref<1xi32, #tpu.memory_space<smem>>, %arg11: memref<16x32xf32, #tpu.memory_space<vmem>>, %arg12: memref<64x64xf32, #tpu.memory_space<vmem>>, %arg13: memref<64x64xf32, #tpu.memory_space<vmem>>, %arg14: memref<1x128xf32, #tpu.memory_space<vmem>>, %arg15: memref<128x32xf32, #tpu.memory_space<vmem>>) attributes {dimension_semantics = [#tpu.dimension_semantics<arbitrary>], iteration_bounds = array<i64: 1>, scalar_prefetch = 0 : i64, scratch_operands = 1 : i64, tpu.core_type = #tpu.core_type<tc>, window_params = [{pipeline_mode = #tpu.pipeline_mode<synchronous>, transform_indices = @transform_0, window_bounds = array<i64: 4, 8>}, {pipeline_mode = #tpu.pipeline_mode<synchronous>, transform_indices = @transform_1, window_bounds = array<i64: 4, 8>}, {pipeline_mode = #tpu.pipeline_mode<synchronous>, transform_indices = @transform_2, window_bounds = array<i64: 4, 8>}, {pipeline_mode = #tpu.pipeline_mode<synchronous>, transform_indices = @transform_3, window_bounds = array<i64: 4, 8>}, {pipeline_mode = #tpu.pipeline_mode<synchronous>, transform_indices = @transform_4, window_bounds = array<i64: 4, 8>}, {pipeline_mode = #tpu.pipeline_mode<synchronous>, transform_indices = @transform_5, window_bounds = array<i64: 4, 8>}, {pipeline_mode = #tpu.pipeline_mode<synchronous>, transform_indices = @transform_6, window_bounds = array<i64: 64, 64>}, {pipeline_mode = #tpu.pipeline_mode<synchronous>, transform_indices = @transform_7, window_bounds = array<i64: 64, 64>}, {pipeline_mode = #tpu.pipeline_mode<synchronous>, transform_indices = @transform_8, window_bounds = array<i64: 16, 32>}, {transform_indices = @transform_9, window_bounds = array<i64: 1>}, {pipeline_mode = #tpu.pipeline_mode<synchronous>, transform_indices = @transform_10, window_bounds = array<i64: 16, 32>}, {pipeline_mode = #tpu.pipeline_mode<synchronous>, transform_indices = @transform_11, window_bounds = array<i64: 64, 64>}, {pipeline_mode = #tpu.pipeline_mode<synchronous>, transform_indices = @transform_12, window_bounds = array<i64: 64, 64>}, {pipeline_mode = #tpu.pipeline_mode<synchronous>, transform_indices = @transform_13, window_bounds = array<i64: 1, 128>}]} {
    %c0 = arith.constant 0 : index
    %c0_0 = arith.constant 0 : index
    %0 = vector.load %arg1[%c0, %c0_0] : memref<4x8xi32, #tpu.memory_space<vmem>>, vector<4x8xi32>
    %c0_1 = arith.constant 0 : index
    %c0_2 = arith.constant 0 : index
    %1 = vector.load %arg2[%c0_1, %c0_2] : memref<4x8xi32, #tpu.memory_space<vmem>>, vector<4x8xi32>
    %c0_3 = arith.constant 0 : index
    %c0_4 = arith.constant 0 : index
    %2 = vector.load %arg3[%c0_3, %c0_4] : memref<4x8xi32, #tpu.memory_space<vmem>>, vector<4x8xi32>
    %3 = tpu.concatenate %0, %1, %2 in 0 : vector<4x8xi32>, vector<4x8xi32>, vector<4x8xi32> -> vector<12x8xi32>
    %c0_5 = arith.constant 0 : index
    %c0_6 = arith.constant 0 : index
    %4 = vector.load %arg4[%c0_5, %c0_6] : memref<4x8xf32, #tpu.memory_space<vmem>>, vector<4x8xf32>
    %c0_7 = arith.constant 0 : index
    %c0_8 = arith.constant 0 : index
    %5 = vector.load %arg5[%c0_7, %c0_8] : memref<4x8xf32, #tpu.memory_space<vmem>>, vector<4x8xf32>
    %c0_9 = arith.constant 0 : index
    %c0_10 = arith.constant 0 : index
    %6 = vector.load %arg6[%c0_9, %c0_10] : memref<4x8xf32, #tpu.memory_space<vmem>>, vector<4x8xf32>
    %7 = tpu.concatenate %4, %5, %6 in 0 : vector<4x8xf32>, vector<4x8xf32>, vector<4x8xf32> -> vector<12x8xf32>
    %8 = tpu.iota {dimensions = array<i32: 2>} : vector<12x8x64xi32>
    %9 = vector.shape_cast %3 : vector<12x8xi32> to vector<12x8x1xi32>
    %10 = vector.broadcast %9 : vector<12x8x1xi32> to vector<12x8x64xi32>
    %11 = arith.cmpi eq, %10, %8 : vector<12x8x64xi32>
    %12 = vector.shape_cast %7 : vector<12x8xf32> to vector<12x8x1xf32>
    %cst = arith.constant 0.000000e+00 : f32
    %13 = vector.shape_cast %12 : vector<12x8x1xf32> to vector<12x8x1xf32>
    %14 = vector.broadcast %13 : vector<12x8x1xf32> to vector<12x8x64xf32>
    %15 = vector.broadcast %cst : f32 to vector<12x8x64xf32>
    %16 = arith.select %11, %14, %15 : vector<12x8x64xi1>, vector<12x8x64xf32>
    %cst_11 = arith.constant dense<0.000000e+00> : vector<12x64xf32>
    %17 = vector.multi_reduction <add>, %16, %cst_11 [1] : vector<12x8x64xf32> to vector<12x64xf32>
    %cst_12 = arith.constant dense<0.000000e+00> : vector<12xf32>
    %18 = vector.multi_reduction <add>, %7, %cst_12 [1] : vector<12x8xf32> to vector<12xf32>
    %19 = vector.shape_cast %18 : vector<12xf32> to vector<12x1xf32>
    %cst_13 = arith.constant 9.99999997E-7 : f32
    %20 = vector.broadcast %cst_13 : f32 to vector<12x1xf32>
    %21 = arith.maximumf %19, %20 : vector<12x1xf32>
    %cst_14 = arith.constant 1.000000e+00 : f32
    %22 = vector.broadcast %cst_14 : f32 to vector<12x1xf32>
    %23 = arith.divf %22, %21 : vector<12x1xf32>
    %c0_15 = arith.constant 0 : index
    %c0_16 = arith.constant 0 : index
    %24 = vector.load %arg7[%c0_15, %c0_16] : memref<64x64xf32, #tpu.memory_space<vmem>>, vector<64x64xf32>
    %c0_17 = arith.constant 0 : index
    %c0_18 = arith.constant 0 : index
    %25 = vector.load %arg8[%c0_17, %c0_18] : memref<64x64xf32, #tpu.memory_space<vmem>>, vector<64x64xf32>
    %26 = vector.extract_strided_slice %24 {offsets = [0, 0], sizes = [64, 32], strides = [1, 1]} : vector<64x64xf32> to vector<64x32xf32>
    %27 = vector.extract_strided_slice %24 {offsets = [0, 32], sizes = [64, 32], strides = [1, 1]} : vector<64x64xf32> to vector<64x32xf32>
    %cst_19 = arith.constant 9.990000e-01 : f32
    %28 = vector.broadcast %cst_19 : f32 to vector<64x32xf32>
    %29 = arith.mulf %28, %27 : vector<64x32xf32>
    %cst_20 = arith.constant 1.000000e-03 : f32
    %30 = vector.broadcast %cst_20 : f32 to vector<64x32xf32>
    %31 = arith.mulf %30, %26 : vector<64x32xf32>
    %32 = arith.addf %29, %31 : vector<64x32xf32>
    %33 = tpu.concatenate %26, %32 in 1 : vector<64x32xf32>, vector<64x32xf32> -> vector<64x64xf32>
    %34 = vector.extract_strided_slice %25 {offsets = [0, 0], sizes = [32, 32], strides = [1, 1]} : vector<64x64xf32> to vector<32x32xf32>
    %35 = vector.extract_strided_slice %25 {offsets = [32, 32], sizes = [32, 32], strides = [1, 1]} : vector<64x64xf32> to vector<32x32xf32>
    %cst_21 = arith.constant 9.990000e-01 : f32
    %36 = vector.broadcast %cst_21 : f32 to vector<32x32xf32>
    %37 = arith.mulf %36, %35 : vector<32x32xf32>
    %cst_22 = arith.constant 1.000000e-03 : f32
    %38 = vector.broadcast %cst_22 : f32 to vector<32x32xf32>
    %39 = arith.mulf %38, %34 : vector<32x32xf32>
    %40 = arith.addf %37, %39 : vector<32x32xf32>
    %cst_23 = arith.constant 0.000000e+00 : f32
    %41 = vector.broadcast %cst_23 : f32 to vector<32x32xf32>
    %42 = tpu.concatenate %34, %41 in 1 : vector<32x32xf32>, vector<32x32xf32> -> vector<32x64xf32>
    %43 = tpu.concatenate %41, %40 in 1 : vector<32x32xf32>, vector<32x32xf32> -> vector<32x64xf32>
    %44 = tpu.concatenate %42, %43 in 0 : vector<32x64xf32>, vector<32x64xf32> -> vector<64x64xf32>
    %c0_24 = arith.constant 0 : index
    %c0_25 = arith.constant 0 : index
    %45 = vector.load %arg12[%c0_24, %c0_25] : memref<64x64xf32, #tpu.memory_space<vmem>>, vector<64x64xf32>
    tpu.vector_store %arg12[%c0_24, %c0_25], %33 {strides = array<i32>} : memref<64x64xf32, #tpu.memory_space<vmem>>, vector<64x64xf32>,
    %c0_26 = arith.constant 0 : index
    %c0_27 = arith.constant 0 : index
    %46 = vector.load %arg13[%c0_26, %c0_27] : memref<64x64xf32, #tpu.memory_space<vmem>>, vector<64x64xf32>
    tpu.vector_store %arg13[%c0_26, %c0_27], %44 {strides = array<i32>} : memref<64x64xf32, #tpu.memory_space<vmem>>, vector<64x64xf32>,
    %47 = arith.truncf %17 : vector<12x64xf32> to vector<12x64xbf16>
    %48 = arith.truncf %33 : vector<64x64xf32> to vector<64x64xbf16>
    %cst_28 = arith.constant dense<0.000000e+00> : vector<12x64xf32>
    %49 = tpu.matmul %47, %48, %cst_28 {dimension_numbers = #tpu.dot_dimension_numbers<[1], [0], [0], [1], [0, 0, 1, 1], [], []>} : vector<12x64xbf16>, vector<64x64xbf16>, vector<12x64xf32> -> vector<12x64xf32>
    %50 = vector.broadcast %23 : vector<12x1xf32> to vector<12x64xf32>
    %51 = arith.mulf %49, %50 : vector<12x64xf32>
    %52 = arith.truncf %51 : vector<12x64xf32> to vector<12x64xbf16>
    %53 = arith.truncf %44 : vector<64x64xf32> to vector<64x64xbf16>
    %cst_29 = arith.constant dense<0.000000e+00> : vector<12x64xf32>
    %54 = tpu.matmul %52, %53, %cst_29 {dimension_numbers = #tpu.dot_dimension_numbers<[1], [0], [0], [1], [0, 0, 1, 1], [], []>} : vector<12x64xbf16>, vector<64x64xbf16>, vector<12x64xf32> -> vector<12x64xf32>
    %55 = tpu.iota {dimensions = array<i32: 1>} : vector<12x64xi32>
    %c32_i32 = arith.constant 32 : i32
    %56 = vector.broadcast %c32_i32 : i32 to vector<12x64xi32>
    %57 = arith.cmpi slt, %55, %56 : vector<12x64xi32>
    %58 = arith.mulf %54, %54 : vector<12x64xf32>
    %cst_30 = arith.constant 0.000000e+00 : f32
    %59 = vector.broadcast %cst_30 : f32 to vector<12x64xf32>
    %60 = arith.select %57, %58, %59 : vector<12x64xi1>, vector<12x64xf32>
    %cst_31 = arith.constant dense<0.000000e+00> : vector<12xf32>
    %61 = vector.multi_reduction <add>, %60, %cst_31 [1] : vector<12x64xf32> to vector<12xf32>
    %62 = vector.shape_cast %61 : vector<12xf32> to vector<12x1xf32>
    %cst_32 = arith.constant 9.99999996E-13 : f32
    %63 = vector.broadcast %cst_32 : f32 to vector<12x1xf32>
    %64 = arith.addf %62, %63 : vector<12x1xf32>
    %65 = math.rsqrt %64 : vector<12x1xf32>
    %cst_33 = arith.constant 0.000000e+00 : f32
    %66 = vector.broadcast %cst_33 : f32 to vector<12x64xf32>
    %67 = arith.select %57, %66, %58 : vector<12x64xi1>, vector<12x64xf32>
    %cst_34 = arith.constant dense<0.000000e+00> : vector<12xf32>
    %68 = vector.multi_reduction <add>, %67, %cst_34 [1] : vector<12x64xf32> to vector<12xf32>
    %69 = vector.shape_cast %68 : vector<12xf32> to vector<12x1xf32>
    %cst_35 = arith.constant 9.99999996E-13 : f32
    %70 = vector.broadcast %cst_35 : f32 to vector<12x1xf32>
    %71 = arith.addf %69, %70 : vector<12x1xf32>
    %72 = math.rsqrt %71 : vector<12x1xf32>
    %73 = vector.shape_cast %65 : vector<12x1xf32> to vector<12x1xf32>
    %74 = vector.broadcast %73 : vector<12x1xf32> to vector<12x64xf32>
    %75 = vector.shape_cast %72 : vector<12x1xf32> to vector<12x1xf32>
    %76 = vector.broadcast %75 : vector<12x1xf32> to vector<12x64xf32>
    %77 = arith.select %57, %74, %76 : vector<12x64xi1>, vector<12x64xf32>
    %78 = arith.mulf %54, %77 : vector<12x64xf32>
    %79 = vector.extract_strided_slice %78 {offsets = [0, 0], sizes = [12, 32], strides = [1, 1]} : vector<12x64xf32> to vector<12x32xf32>
    %80 = vector.extract_strided_slice %78 {offsets = [0, 32], sizes = [12, 32], strides = [1, 1]} : vector<12x64xf32> to vector<12x32xf32>
    %81 = vector.extract_strided_slice %79 {offsets = [0, 0], sizes = [4, 32], strides = [1, 1]} : vector<12x32xf32> to vector<4x32xf32>
    %82 = vector.extract_strided_slice %79 {offsets = [4, 0], sizes = [4, 32], strides = [1, 1]} : vector<12x32xf32> to vector<4x32xf32>
    %83 = vector.extract_strided_slice %79 {offsets = [8, 0], sizes = [4, 32], strides = [1, 1]} : vector<12x32xf32> to vector<4x32xf32>
    %84 = vector.extract_strided_slice %80 {offsets = [0, 0], sizes = [4, 32], strides = [1, 1]} : vector<12x32xf32> to vector<4x32xf32>
    %85 = vector.extract_strided_slice %80 {offsets = [4, 0], sizes = [4, 32], strides = [1, 1]} : vector<12x32xf32> to vector<4x32xf32>
    %86 = vector.extract_strided_slice %80 {offsets = [8, 0], sizes = [4, 32], strides = [1, 1]} : vector<12x32xf32> to vector<4x32xf32>
    %87 = vector.extract_strided_slice %80 {offsets = [4, 0], sizes = [8, 32], strides = [1, 1]} : vector<12x32xf32> to vector<8x32xf32>
    %cst_36 = arith.constant dense<0xFF800000> : vector<4xf32>
    %88 = vector.multi_reduction <maximumf>, %81, %cst_36 [1] : vector<4x32xf32> to vector<4xf32>
    %89 = vector.shape_cast %88 : vector<4xf32> to vector<4x1xf32>
    %90 = vector.broadcast %89 : vector<4x1xf32> to vector<4x32xf32>
    %91 = arith.subf %81, %90 : vector<4x32xf32>
    %92 = math.exp %91 : vector<4x32xf32>
    %cst_37 = arith.constant dense<0.000000e+00> : vector<4xf32>
    %93 = vector.multi_reduction <add>, %92, %cst_37 [1] : vector<4x32xf32> to vector<4xf32>
    %94 = vector.shape_cast %93 : vector<4xf32> to vector<4x1xf32>
    %95 = math.log %94 : vector<4x1xf32>
    %96 = vector.broadcast %95 : vector<4x1xf32> to vector<4x32xf32>
    %97 = arith.subf %91, %96 : vector<4x32xf32>
    %cst_38 = arith.constant dense<0xFF800000> : vector<4xf32>
    %98 = vector.multi_reduction <maximumf>, %85, %cst_38 [1] : vector<4x32xf32> to vector<4xf32>
    %99 = vector.shape_cast %98 : vector<4xf32> to vector<4x1xf32>
    %100 = vector.broadcast %99 : vector<4x1xf32> to vector<4x32xf32>
    %101 = arith.subf %85, %100 : vector<4x32xf32>
    %102 = math.exp %101 : vector<4x32xf32>
    %cst_39 = arith.constant dense<0.000000e+00> : vector<4xf32>
    %103 = vector.multi_reduction <add>, %102, %cst_39 [1] : vector<4x32xf32> to vector<4xf32>
    %104 = vector.shape_cast %103 : vector<4xf32> to vector<4x1xf32>
    %105 = math.log %104 : vector<4x1xf32>
    %106 = vector.broadcast %105 : vector<4x1xf32> to vector<4x32xf32>
    %107 = arith.subf %101, %106 : vector<4x32xf32>
    %108 = math.exp %107 : vector<4x32xf32>
    %109 = arith.subf %107, %97 : vector<4x32xf32>
    %110 = arith.mulf %108, %109 : vector<4x32xf32>
    %cst_40 = arith.constant dense<0.000000e+00> : vector<4xf32>
    %111 = vector.multi_reduction <add>, %110, %cst_40 [1] : vector<4x32xf32> to vector<4xf32>
    %112 = vector.shape_cast %111 : vector<4xf32> to vector<4x1xf32>
    %cst_41 = arith.constant dense<0.000000e+00> : vector<1xf32>
    %113 = vector.multi_reduction <add>, %112, %cst_41 [0] : vector<4x1xf32> to vector<1xf32>
    %114 = vector.shape_cast %113 : vector<1xf32> to vector<1x1xf32>
    %cst_42 = arith.constant 2.500000e-01 : f32
    %115 = vector.broadcast %cst_42 : f32 to vector<1x1xf32>
    %116 = arith.mulf %114, %115 : vector<1x1xf32>
    %117 = arith.mulf %81, %82 : vector<4x32xf32>
    %cst_43 = arith.constant dense<0.000000e+00> : vector<4xf32>
    %118 = vector.multi_reduction <add>, %117, %cst_43 [1] : vector<4x32xf32> to vector<4xf32>
    %119 = vector.shape_cast %118 : vector<4xf32> to vector<4x1xf32>
    %cst_44 = arith.constant 2.000000e+01 : f32
    %120 = vector.broadcast %cst_44 : f32 to vector<4x1xf32>
    %121 = arith.mulf %119, %120 : vector<4x1xf32>
    %122 = arith.mulf %81, %83 : vector<4x32xf32>
    %cst_45 = arith.constant dense<0.000000e+00> : vector<4xf32>
    %123 = vector.multi_reduction <add>, %122, %cst_45 [1] : vector<4x32xf32> to vector<4xf32>
    %124 = vector.shape_cast %123 : vector<4xf32> to vector<4x1xf32>
    %cst_46 = arith.constant 2.000000e+01 : f32
    %125 = vector.broadcast %cst_46 : f32 to vector<4x1xf32>
    %126 = arith.mulf %124, %125 : vector<4x1xf32>
    %127 = arith.mulf %84, %85 : vector<4x32xf32>
    %cst_47 = arith.constant dense<0.000000e+00> : vector<4xf32>
    %128 = vector.multi_reduction <add>, %127, %cst_47 [1] : vector<4x32xf32> to vector<4xf32>
    %129 = vector.shape_cast %128 : vector<4xf32> to vector<4x1xf32>
    %cst_48 = arith.constant 2.000000e+01 : f32
    %130 = vector.broadcast %cst_48 : f32 to vector<4x1xf32>
    %131 = arith.mulf %129, %130 : vector<4x1xf32>
    %132 = arith.mulf %84, %86 : vector<4x32xf32>
    %cst_49 = arith.constant dense<0.000000e+00> : vector<4xf32>
    %133 = vector.multi_reduction <add>, %132, %cst_49 [1] : vector<4x32xf32> to vector<4xf32>
    %134 = vector.shape_cast %133 : vector<4xf32> to vector<4x1xf32>
    %cst_50 = arith.constant 2.000000e+01 : f32
    %135 = vector.broadcast %cst_50 : f32 to vector<4x1xf32>
    %136 = arith.mulf %134, %135 : vector<4x1xf32>
    %137 = arith.subf %121, %126 : vector<4x1xf32>
    %138 = arith.subf %131, %136 : vector<4x1xf32>
    %139 = arith.subf %137, %138 : vector<4x1xf32>
    %cst_51 = arith.constant 3.000000e-01 : f32
    %140 = vector.broadcast %cst_51 : f32 to vector<4x1xf32>
    %141 = arith.mulf %140, %139 : vector<4x1xf32>
    %cst_52 = arith.constant 0.000000e+00 : f32
    %142 = vector.broadcast %cst_52 : f32 to vector<4x1xf32>
    %143 = arith.maximumf %141, %142 : vector<4x1xf32>
    %144 = math.absf %141 : vector<4x1xf32>
    %cst_53 = arith.constant 0.000000e+00 : f32
    %145 = vector.broadcast %cst_53 : f32 to vector<4x1xf32>
    %146 = arith.subf %145, %144 : vector<4x1xf32>
    %147 = math.exp %146 : vector<4x1xf32>
    %cst_54 = arith.constant 1.000000e+00 : f32
    %148 = vector.broadcast %cst_54 : f32 to vector<4x1xf32>
    %149 = arith.addf %148, %147 : vector<4x1xf32>
    %150 = math.log %149 : vector<4x1xf32>
    %151 = arith.addf %143, %150 : vector<4x1xf32>
    %cst_55 = arith.constant 0.899999976 : f32
    %152 = vector.broadcast %cst_55 : f32 to vector<4x1xf32>
    %153 = arith.mulf %152, %141 : vector<4x1xf32>
    %154 = arith.subf %151, %153 : vector<4x1xf32>
    %cst_56 = arith.constant dense<0.000000e+00> : vector<1xf32>
    %155 = vector.multi_reduction <add>, %154, %cst_56 [0] : vector<4x1xf32> to vector<1xf32>
    %156 = vector.shape_cast %155 : vector<1xf32> to vector<1x1xf32>
    %cst_57 = arith.constant 2.500000e-01 : f32
    %157 = vector.broadcast %cst_57 : f32 to vector<1x1xf32>
    %158 = arith.mulf %156, %157 : vector<1x1xf32>
    %cst_58 = arith.constant 0.000000e+00 : f32
    %159 = vector.broadcast %cst_58 : f32 to vector<128x32xf32>
    %c0_59 = arith.constant 0 : index
    %c0_60 = arith.constant 0 : index
    %160 = vector.load %arg15[%c0_59, %c0_60] : memref<128x32xf32, #tpu.memory_space<vmem>>, vector<128x32xf32>
    tpu.vector_store %arg15[%c0_59, %c0_60], %159 {strides = array<i32>} : memref<128x32xf32, #tpu.memory_space<vmem>>, vector<128x32xf32>,
    %c0_61 = arith.constant 0 : index
    %c0_62 = arith.constant 0 : index
    %161 = vector.load %arg15[%c0_61, %c0_62] : memref<128x32xf32, #tpu.memory_space<vmem>>, vector<8x32xf32>
    tpu.vector_store %arg15[%c0_61, %c0_62], %87 {strides = array<i32>} : memref<128x32xf32, #tpu.memory_space<vmem>>, vector<8x32xf32>,
    %c0_63 = arith.constant 0 : index
    %c0_64 = arith.constant 0 : index
    %162 = vector.load %arg9[%c0_63, %c0_64] : memref<16x32xf32, #tpu.memory_space<vmem>>, vector<16x32xf32>
    %c8 = arith.constant 8 : index
    %c0_65 = arith.constant 0 : index
    %163 = vector.load %arg15[%c8, %c0_65] : memref<128x32xf32, #tpu.memory_space<vmem>>, vector<16x32xf32>
    tpu.vector_store %arg15[%c8, %c0_65], %162 {strides = array<i32>} : memref<128x32xf32, #tpu.memory_space<vmem>>, vector<16x32xf32>,
    %164 = arith.truncf %81 : vector<4x32xf32> to vector<4x32xbf16>
    %c0_66 = arith.constant 0 : index
    %c0_67 = arith.constant 0 : index
    %165 = vector.load %arg15[%c0_66, %c0_67] : memref<128x32xf32, #tpu.memory_space<vmem>>, vector<128x32xf32>
    %166 = arith.truncf %165 : vector<128x32xf32> to vector<128x32xbf16>
    %cst_68 = arith.constant dense<0.000000e+00> : vector<4x128xf32>
    %167 = tpu.matmul %164, %166, %cst_68 {dimension_numbers = #tpu.dot_dimension_numbers<[1], [1], [0], [0], [0, 0, 1, 0], [], []>} : vector<4x32xbf16>, vector<128x32xbf16>, vector<4x128xf32> -> vector<4x128xf32>
    %168 = tpu.iota {dimensions = array<i32: 0>} : vector<4x128xi32>
    %169 = tpu.iota {dimensions = array<i32: 1>} : vector<4x128xi32>
    %170 = arith.cmpi eq, %169, %168 : vector<4x128xi32>
    %c4_i32 = arith.constant 4 : i32
    %171 = vector.broadcast %c4_i32 : i32 to vector<4x128xi32>
    %172 = arith.addi %168, %171 : vector<4x128xi32>
    %173 = arith.cmpi eq, %169, %172 : vector<4x128xi32>
    %c24_i32 = arith.constant 24 : i32
    %174 = vector.broadcast %c24_i32 : i32 to vector<4x128xi32>
    %175 = arith.cmpi sge, %169, %174 : vector<4x128xi32>
    %176 = arith.ori %173, %175 : vector<4x128xi1>
    %cst_69 = arith.constant -1.000000e+30 : f32
    %177 = vector.broadcast %cst_69 : f32 to vector<4x128xf32>
    %178 = arith.select %176, %177, %167 : vector<4x128xi1>, vector<4x128xf32>
    %cst_70 = arith.constant dense<0xFF800000> : vector<4xf32>
    %179 = vector.multi_reduction <maximumf>, %178, %cst_70 [1] : vector<4x128xf32> to vector<4xf32>
    %180 = vector.shape_cast %179 : vector<4xf32> to vector<4x1xf32>
    %181 = vector.broadcast %180 : vector<4x1xf32> to vector<4x128xf32>
    %182 = arith.subf %178, %181 : vector<4x128xf32>
    %183 = math.exp %182 : vector<4x128xf32>
    %cst_71 = arith.constant dense<0.000000e+00> : vector<4xf32>
    %184 = vector.multi_reduction <add>, %183, %cst_71 [1] : vector<4x128xf32> to vector<4xf32>
    %185 = vector.shape_cast %184 : vector<4xf32> to vector<4x1xf32>
    %186 = math.log %185 : vector<4x1xf32>
    %187 = arith.addf %180, %186 : vector<4x1xf32>
    %cst_72 = arith.constant 0.000000e+00 : f32
    %188 = vector.broadcast %cst_72 : f32 to vector<4x128xf32>
    %189 = arith.select %170, %167, %188 : vector<4x128xi1>, vector<4x128xf32>
    %cst_73 = arith.constant dense<0.000000e+00> : vector<4xf32>
    %190 = vector.multi_reduction <add>, %189, %cst_73 [1] : vector<4x128xf32> to vector<4xf32>
    %191 = vector.shape_cast %190 : vector<4xf32> to vector<4x1xf32>
    %cst_74 = arith.constant 0.000000e+00 : f32
    %192 = vector.broadcast %cst_74 : f32 to vector<4x128xf32>
    %193 = arith.select %176, %192, %167 : vector<4x128xi1>, vector<4x128xf32>
    %cst_75 = arith.constant dense<0.000000e+00> : vector<4xf32>
    %194 = vector.multi_reduction <add>, %193, %cst_75 [1] : vector<4x128xf32> to vector<4xf32>
    %195 = vector.shape_cast %194 : vector<4xf32> to vector<4x1xf32>
    %196 = arith.subf %187, %191 : vector<4x1xf32>
    %cst_76 = arith.constant 0.899999976 : f32
    %197 = vector.broadcast %cst_76 : f32 to vector<4x1xf32>
    %198 = arith.mulf %197, %196 : vector<4x1xf32>
    %cst_77 = arith.constant 2.300000e+01 : f32
    %199 = vector.broadcast %cst_77 : f32 to vector<4x1xf32>
    %200 = arith.mulf %199, %187 : vector<4x1xf32>
    %201 = arith.subf %200, %195 : vector<4x1xf32>
    %cst_78 = arith.constant 2.300000e+01 : f32
    %202 = vector.broadcast %cst_78 : f32 to vector<4x1xf32>
    %203 = arith.divf %201, %202 : vector<4x1xf32>
    %cst_79 = arith.constant 1.000000e-01 : f32
    %204 = vector.broadcast %cst_79 : f32 to vector<4x1xf32>
    %205 = arith.mulf %204, %203 : vector<4x1xf32>
    %206 = arith.addf %198, %205 : vector<4x1xf32>
    %cst_80 = arith.constant dense<0.000000e+00> : vector<1xf32>
    %207 = vector.multi_reduction <add>, %206, %cst_80 [0] : vector<4x1xf32> to vector<1xf32>
    %208 = vector.shape_cast %207 : vector<1xf32> to vector<1x1xf32>
    %cst_81 = arith.constant 2.500000e-01 : f32
    %209 = vector.broadcast %cst_81 : f32 to vector<1x1xf32>
    %210 = arith.mulf %208, %209 : vector<1x1xf32>
    %211 = arith.cmpf oge, %191, %180 : vector<4x1xf32>
    %212 = arith.extui %211 : vector<4x1xi1> to vector<4x1xi32>
    %213 = arith.sitofp %212 : vector<4x1xi32> to vector<4x1xf32>
    %cst_82 = arith.constant dense<0.000000e+00> : vector<1xf32>
    %214 = vector.multi_reduction <add>, %213, %cst_82 [0] : vector<4x1xf32> to vector<1xf32>
    %215 = vector.shape_cast %214 : vector<1xf32> to vector<1x1xf32>
    %cst_83 = arith.constant 1.000000e+02 : f32
    %216 = vector.broadcast %cst_83 : f32 to vector<1x1xf32>
    %217 = arith.mulf %216, %215 : vector<1x1xf32>
    %cst_84 = arith.constant 2.500000e-01 : f32
    %218 = vector.broadcast %cst_84 : f32 to vector<1x1xf32>
    %219 = arith.mulf %217, %218 : vector<1x1xf32>
    %cst_85 = arith.constant 0.949999988 : f32
    %220 = vector.broadcast %cst_85 : f32 to vector<1x1xf32>
    %221 = arith.mulf %220, %210 : vector<1x1xf32>
    %cst_86 = arith.constant 5.000000e-02 : f32
    %222 = vector.broadcast %cst_86 : f32 to vector<1x1xf32>
    %223 = arith.mulf %222, %158 : vector<1x1xf32>
    %224 = arith.addf %221, %223 : vector<1x1xf32>
    %cst_87 = arith.constant dense<0.000000e+00> : vector<32xf32>
    %225 = vector.multi_reduction <add>, %81, %cst_87 [0] : vector<4x32xf32> to vector<32xf32>
    %226 = vector.shape_cast %225 : vector<32xf32> to vector<1x32xf32>
    %cst_88 = arith.constant 4.000000e+00 : f32
    %227 = vector.broadcast %cst_88 : f32 to vector<1x32xf32>
    %228 = arith.divf %226, %227 : vector<1x32xf32>
    %229 = vector.broadcast %228 : vector<1x32xf32> to vector<4x32xf32>
    %230 = arith.subf %81, %229 : vector<4x32xf32>
    %231 = vector.broadcast %228 : vector<1x32xf32> to vector<4x32xf32>
    %232 = arith.subf %81, %231 : vector<4x32xf32>
    %233 = arith.mulf %230, %232 : vector<4x32xf32>
    %cst_89 = arith.constant dense<0.000000e+00> : vector<32xf32>
    %234 = vector.multi_reduction <add>, %233, %cst_89 [0] : vector<4x32xf32> to vector<32xf32>
    %235 = vector.shape_cast %234 : vector<32xf32> to vector<1x32xf32>
    %cst_90 = arith.constant 3.000000e+00 : f32
    %236 = vector.broadcast %cst_90 : f32 to vector<1x32xf32>
    %237 = arith.divf %235, %236 : vector<1x32xf32>
    %238 = math.sqrt %237 : vector<1x32xf32>
    %cst_91 = arith.constant dense<0.000000e+00> : vector<1xf32>
    %239 = vector.multi_reduction <add>, %238, %cst_91 [1] : vector<1x32xf32> to vector<1xf32>
    %240 = vector.shape_cast %239 : vector<1xf32> to vector<1x1xf32>
    %cst_92 = arith.constant 3.200000e+01 : f32
    %241 = vector.broadcast %cst_92 : f32 to vector<1x1xf32>
    %242 = arith.divf %240, %241 : vector<1x1xf32>
    %cst_93 = arith.constant dense<0.000000e+00> : vector<32xf32>
    %243 = vector.multi_reduction <add>, %82, %cst_93 [0] : vector<4x32xf32> to vector<32xf32>
    %244 = vector.shape_cast %243 : vector<32xf32> to vector<1x32xf32>
    %cst_94 = arith.constant 4.000000e+00 : f32
    %245 = vector.broadcast %cst_94 : f32 to vector<1x32xf32>
    %246 = arith.divf %244, %245 : vector<1x32xf32>
    %247 = vector.broadcast %246 : vector<1x32xf32> to vector<4x32xf32>
    %248 = arith.subf %82, %247 : vector<4x32xf32>
    %249 = vector.broadcast %246 : vector<1x32xf32> to vector<4x32xf32>
    %250 = arith.subf %82, %249 : vector<4x32xf32>
    %251 = arith.mulf %248, %250 : vector<4x32xf32>
    %cst_95 = arith.constant dense<0.000000e+00> : vector<32xf32>
    %252 = vector.multi_reduction <add>, %251, %cst_95 [0] : vector<4x32xf32> to vector<32xf32>
    %253 = vector.shape_cast %252 : vector<32xf32> to vector<1x32xf32>
    %cst_96 = arith.constant 3.000000e+00 : f32
    %254 = vector.broadcast %cst_96 : f32 to vector<1x32xf32>
    %255 = arith.divf %253, %254 : vector<1x32xf32>
    %256 = math.sqrt %255 : vector<1x32xf32>
    %cst_97 = arith.constant dense<0.000000e+00> : vector<1xf32>
    %257 = vector.multi_reduction <add>, %256, %cst_97 [1] : vector<1x32xf32> to vector<1xf32>
    %258 = vector.shape_cast %257 : vector<1xf32> to vector<1x1xf32>
    %cst_98 = arith.constant 3.200000e+01 : f32
    %259 = vector.broadcast %cst_98 : f32 to vector<1x1xf32>
    %260 = arith.divf %258, %259 : vector<1x1xf32>
    %cst_99 = arith.constant dense<0.000000e+00> : vector<32xf32>
    %261 = vector.multi_reduction <add>, %83, %cst_99 [0] : vector<4x32xf32> to vector<32xf32>
    %262 = vector.shape_cast %261 : vector<32xf32> to vector<1x32xf32>
    %cst_100 = arith.constant 4.000000e+00 : f32
    %263 = vector.broadcast %cst_100 : f32 to vector<1x32xf32>
    %264 = arith.divf %262, %263 : vector<1x32xf32>
    %265 = vector.broadcast %264 : vector<1x32xf32> to vector<4x32xf32>
    %266 = arith.subf %83, %265 : vector<4x32xf32>
    %267 = vector.broadcast %264 : vector<1x32xf32> to vector<4x32xf32>
    %268 = arith.subf %83, %267 : vector<4x32xf32>
    %269 = arith.mulf %266, %268 : vector<4x32xf32>
    %cst_101 = arith.constant dense<0.000000e+00> : vector<32xf32>
    %270 = vector.multi_reduction <add>, %269, %cst_101 [0] : vector<4x32xf32> to vector<32xf32>
    %271 = vector.shape_cast %270 : vector<32xf32> to vector<1x32xf32>
    %cst_102 = arith.constant 3.000000e+00 : f32
    %272 = vector.broadcast %cst_102 : f32 to vector<1x32xf32>
    %273 = arith.divf %271, %272 : vector<1x32xf32>
    %274 = math.sqrt %273 : vector<1x32xf32>
    %cst_103 = arith.constant dense<0.000000e+00> : vector<1xf32>
    %275 = vector.multi_reduction <add>, %274, %cst_103 [1] : vector<1x32xf32> to vector<1xf32>
    %276 = vector.shape_cast %275 : vector<1xf32> to vector<1x1xf32>
    %cst_104 = arith.constant 3.200000e+01 : f32
    %277 = vector.broadcast %cst_104 : f32 to vector<1x1xf32>
    %278 = arith.divf %276, %277 : vector<1x1xf32>
    %c0_105 = arith.constant 0 : index
    %279 = memref.load %arg10[%c0_105] : memref<1xi32, #tpu.memory_space<smem>>
    %280 = tpu.assume_multiple %279, 8 : i32
    %c0_106 = arith.constant 0 : index
    %c0_107 = arith.constant 0 : index
    %281 = vector.load %arg9[%c0_106, %c0_107] : memref<16x32xf32, #tpu.memory_space<vmem>>, vector<16x32xf32>
    %c0_108 = arith.constant 0 : index
    %c0_109 = arith.constant 0 : index
    %282 = vector.load %arg11[%c0_108, %c0_109] : memref<16x32xf32, #tpu.memory_space<vmem>>, vector<16x32xf32>
    tpu.vector_store %arg11[%c0_108, %c0_109], %281 {strides = array<i32>} : memref<16x32xf32, #tpu.memory_space<vmem>>, vector<16x32xf32>,
    %283 = arith.index_cast %280 : i32 to index
    %c0_110 = arith.constant 0 : index
    %284 = vector.load %arg11[%283, %c0_110] : memref<16x32xf32, #tpu.memory_space<vmem>>, vector<8x32xf32>
    tpu.vector_store %arg11[%283, %c0_110], %87 {strides = array<i32>} : memref<16x32xf32, #tpu.memory_space<vmem>>, vector<8x32xf32>,
    %cst_111 = arith.constant 0.000000e+00 : f32
    %285 = vector.broadcast %cst_111 : f32 to vector<1x120xf32>
    %286 = tpu.concatenate %224, %210, %158, %116, %219, %242, %260, %278, %285 in 1 : vector<1x1xf32>, vector<1x1xf32>, vector<1x1xf32>, vector<1x1xf32>, vector<1x1xf32>, vector<1x1xf32>, vector<1x1xf32>, vector<1x1xf32>, vector<1x120xf32> -> vector<1x128xf32>
    %c0_112 = arith.constant 0 : index
    %c0_113 = arith.constant 0 : index
    %287 = vector.load %arg14[%c0_112, %c0_113] : memref<1x128xf32, #tpu.memory_space<vmem>>, vector<1x128xf32>
    tpu.vector_store %arg14[%c0_112, %c0_113], %286 {strides = array<i32>} : memref<1x128xf32, #tpu.memory_space<vmem>>, vector<1x128xf32>,
    return
  }
  func.func @transform_0(%arg0: i32) -> (i32, i32) {
    %c0_i32 = arith.constant 0 : i32
    %c0_i32_0 = arith.constant 0 : i32
    %c0_i32_1 = arith.constant 0 : i32
    return %c0_i32, %c0_i32_0 : i32, i32
  }
  func.func @transform_1(%arg0: i32) -> (i32, i32) {
    %c0_i32 = arith.constant 0 : i32
    %c0_i32_0 = arith.constant 0 : i32
    %c0_i32_1 = arith.constant 0 : i32
    return %c0_i32, %c0_i32_0 : i32, i32
  }
  func.func @transform_2(%arg0: i32) -> (i32, i32) {
    %c0_i32 = arith.constant 0 : i32
    %c0_i32_0 = arith.constant 0 : i32
    %c0_i32_1 = arith.constant 0 : i32
    return %c0_i32, %c0_i32_0 : i32, i32
  }
  func.func @transform_3(%arg0: i32) -> (i32, i32) {
    %c0_i32 = arith.constant 0 : i32
    %c0_i32_0 = arith.constant 0 : i32
    %c0_i32_1 = arith.constant 0 : i32
    return %c0_i32, %c0_i32_0 : i32, i32
  }
  func.func @transform_4(%arg0: i32) -> (i32, i32) {
    %c0_i32 = arith.constant 0 : i32
    %c0_i32_0 = arith.constant 0 : i32
    %c0_i32_1 = arith.constant 0 : i32
    return %c0_i32, %c0_i32_0 : i32, i32
  }
  func.func @transform_5(%arg0: i32) -> (i32, i32) {
    %c0_i32 = arith.constant 0 : i32
    %c0_i32_0 = arith.constant 0 : i32
    %c0_i32_1 = arith.constant 0 : i32
    return %c0_i32, %c0_i32_0 : i32, i32
  }
  func.func @transform_6(%arg0: i32) -> (i32, i32) {
    %c0_i32 = arith.constant 0 : i32
    %c0_i32_0 = arith.constant 0 : i32
    %c0_i32_1 = arith.constant 0 : i32
    return %c0_i32, %c0_i32_0 : i32, i32
  }
  func.func @transform_7(%arg0: i32) -> (i32, i32) {
    %c0_i32 = arith.constant 0 : i32
    %c0_i32_0 = arith.constant 0 : i32
    %c0_i32_1 = arith.constant 0 : i32
    return %c0_i32, %c0_i32_0 : i32, i32
  }
  func.func @transform_8(%arg0: i32) -> (i32, i32) {
    %c0_i32 = arith.constant 0 : i32
    %c0_i32_0 = arith.constant 0 : i32
    %c0_i32_1 = arith.constant 0 : i32
    return %c0_i32, %c0_i32_0 : i32, i32
  }
  func.func @transform_9(%arg0: i32) -> i32 {
    %c0_i32 = arith.constant 0 : i32
    %c0_i32_0 = arith.constant 0 : i32
    return %c0_i32 : i32
  }
  func.func @transform_10(%arg0: i32) -> (i32, i32) {
    %c0_i32 = arith.constant 0 : i32
    %c0_i32_0 = arith.constant 0 : i32
    %c0_i32_1 = arith.constant 0 : i32
    return %c0_i32, %c0_i32_0 : i32, i32
  }
  func.func @transform_11(%arg0: i32) -> (i32, i32) {
    %c0_i32 = arith.constant 0 : i32
    %c0_i32_0 = arith.constant 0 : i32
    %c0_i32_1 = arith.constant 0 : i32
    return %c0_i32, %c0_i32_0 : i32, i32
  }
  func.func @transform_12(%arg0: i32) -> (i32, i32) {
    %c0_i32 = arith.constant 0 : i32
    %c0_i32_0 = arith.constant 0 : i32
    %c0_i32_1 = arith.constant 0 : i32
    return %c0_i32, %c0_i32_0 : i32, i32
  }
  func.func @transform_13(%arg0: i32) -> (i32, i32) {
    %c0_i32 = arith.constant 0 : i32
    %c0_i32_0 = arith.constant 0 : i32
    %c0_i32_1 = arith.constant 0 : i32
    return %c0_i32, %c0_i32_0 : i32, i32
  }
}

</mosaic_0001>

<llo_original>
// kernel: tpu_custom_call.1
$region0: #{tpu_custom_call.1}
  #allocation0 [shape = 'u32[]', space=smem, size = 0x4, offset = 0x4, fixed_abs, tag = 'smem constant byte address 0x4 - core index']
  #allocation1 [shape = 'u32[72,128]{1,0:T(1,128)}', space=vmem, size = 0x9000, scoped, tag = 'internal scratch']
  #allocation2 [shape = 'f32[128,32]{1,0:T(8,128)}', space=vmem, size = 0x10000, scoped, tag = 'scratch operand']
  #allocation3 [shape = 's32[1]{0:T(128)S(6)}', space=smem, size = 0x200, scoped, tag = 'scoped memory for tpu_custom_call.1']
  %s0 = inlined_call_operand.vmem [shape: s32[4,8], index: 0, kind: input, shape index: {}]
  %s1 = inlined_call_operand.vmem [shape: s32[4,8], index: 1, kind: input, shape index: {}]
  %s2 = inlined_call_operand.vmem [shape: s32[4,8], index: 2, kind: input, shape index: {}]
  %s3 = inlined_call_operand.vmem [shape: f32[4,8], index: 3, kind: input, shape index: {}]
  %s4 = inlined_call_operand.vmem [shape: f32[4,8], index: 4, kind: input, shape index: {}]
  %s5 = inlined_call_operand.vmem [shape: f32[4,8], index: 5, kind: input, shape index: {}]
  %s6 = inlined_call_operand.hbm [shape: f32[64,64], index: 6, kind: input, shape index: {}, may-alias: {6,11}]
  %s7 = inlined_call_operand.hbm [shape: f32[64,64], index: 7, kind: input, shape index: {}, may-alias: {7,12}]
  %s8 = inlined_call_operand.hbm [shape: f32[16,32], index: 8, kind: input, shape index: {}, may-alias: {8,10}]
  %s9 = inlined_call_operand.<no memory space> [shape: s32[1], index: 9, kind: input, shape index: {}]
  %s10 = inlined_call_operand.hbm [shape: f32[16,32], index: 10, kind: output, shape index: {0}, may-alias: {8,10}]
  %s11 = inlined_call_operand.hbm [shape: f32[64,64], index: 11, kind: output, shape index: {1}, may-alias: {6,11}]
  %s12 = inlined_call_operand.hbm [shape: f32[64,64], index: 12, kind: output, shape index: {2}, may-alias: {7,12}]
  %s13 = inlined_call_operand.hbm [shape: f32[1,128], index: 13, kind: output, shape index: {3}]
  %14 = xla_tuple %s10, %s11, %s12, %s13
  %s15 = sld [smem:[#allocation0]]
  $region86: #{tpu_custom_call.1} parent=0
    _
  %s17 = ssub.s32 1, %s15
  %s18 = scalar_select 0, %s17, %s15
  %19 = sst [smem:[#allocation3]] %s9
  $region1: #{tpu_custom_call.1} parent=0
    #allocation4 [shape = 'u8[32768]{0}', space=vmem, size = 0x8000, scoped, tag = 'input window, operand 6, single buffered']
    #allocation5 [shape = 's32[1]{0}', space=sflag, size = 0x4, scoped, tag = 'scoped memory for tpu_custom_call.1']
    #allocation6 [shape = 's32[1]{0}', space=sflag, size = 0x4, scoped, tag = 'scoped memory for tpu_custom_call.1']
    #allocation7 [shape = 'u8[32768]{0}', space=vmem, size = 0x8000, scoped, tag = 'input window, operand 7, single buffered']
    #allocation8 [shape = 's32[1]{0}', space=sflag, size = 0x4, scoped, tag = 'scoped memory for tpu_custom_call.1']
    #allocation9 [shape = 'u8[8192]{0}', space=vmem, size = 0x2000, scoped, tag = 'input window, operand 8, single buffered']
    #allocation10 [shape = 'u8[8192]{0}', space=vmem, size = 0x2000, scoped, tag = 'output window, operand 0, single buffered']
    #allocation11 [shape = 'u8[32768]{0}', space=vmem, size = 0x8000, scoped, tag = 'output window, operand 1, single buffered']
    #allocation12 [shape = 's32[1]{0}', space=sflag, size = 0x4, scoped, tag = 'scoped memory for tpu_custom_call.1']
    #allocation13 [shape = 'u8[32768]{0}', space=vmem, size = 0x8000, scoped, tag = 'output window, operand 2, single buffered']
    #allocation14 [shape = 'u8[512]{0}', space=vmem, size = 0x400, scoped, tag = 'output window, operand 3, single buffered']
    #allocation15 [shape = 's32[1]{0}', space=sflag, size = 0x4, scoped, tag = 'scoped memory for tpu_custom_call.1']
    %20 = vsyncpa [#allocation5], 0
    %21 = vsyncpa [#allocation8], 0
    %22 = vsyncpa [#allocation6], 0
    %23 = vsyncpa [#allocation12], 0
    %24 = vsyncpa [#allocation15], 0
    // Predicated region
    $region2: #{tpu_custom_call.1} parent=1 // pred_check
      _
    $region3: #{tpu_custom_call.1} parent=1 // pred_check_branch
      %26 = sbr.rel (0) target = $region5
    $region4: #{tpu_custom_call.1} parent=1 // pred_region
      _
    $region5: #{tpu_custom_call.1} parent=1 // pred_fallthru
      _
    // Predicated region
    $region6: #{tpu_custom_call.1} parent=1 // pred_check
      _
    $region7: #{tpu_custom_call.1} parent=1 // pred_check_branch
      %28 = sbr.rel (0) target = $region9
    $region8: #{tpu_custom_call.1} parent=1 // pred_region
      _
    $region9: #{tpu_custom_call.1} parent=1 // pred_fallthru
      _
    // Predicated region
    $region10: #{tpu_custom_call.1} parent=1 // pred_check
      _
    $region11: #{tpu_custom_call.1} parent=1 // pred_check_branch
      %30 = sbr.rel (0) target = $region13
    $region12: #{tpu_custom_call.1} parent=1 // pred_region
      _
    $region13: #{tpu_custom_call.1} parent=1 // pred_fallthru
      _
    // Predicated region
    $region14: #{tpu_custom_call.1} parent=1 // pred_check
      _
    $region15: #{tpu_custom_call.1} parent=1 // pred_check_branch
      %32 = sbr.rel (0) target = $region17
    $region16: #{tpu_custom_call.1} parent=1 // pred_region
      _
    $region17: #{tpu_custom_call.1} parent=1 // pred_fallthru
      _
    // Predicated region
    $region18: #{tpu_custom_call.1} parent=1 // pred_check
      _
    $region19: #{tpu_custom_call.1} parent=1 // pred_check_branch
      %34 = sbr.rel (0) target = $region21
    $region20: #{tpu_custom_call.1} parent=1 // pred_region
      _
    $region21: #{tpu_custom_call.1} parent=1 // pred_fallthru
      _
    // Predicated region
    $region22: #{tpu_custom_call.1} parent=1 // pred_check
      _
    $region23: #{tpu_custom_call.1} parent=1 // pred_check_branch
      %36 = sbr.rel (0) target = $region25
    $region24: #{tpu_custom_call.1} parent=1 // pred_region
      _
    $region25: #{tpu_custom_call.1} parent=1 // pred_fallthru
      _
    // Predicated region
    $region26: #{tpu_custom_call.1} parent=1 // pred_check
      _
    $region27: #{tpu_custom_call.1} parent=1 // pred_check_branch
      %38 = sbr.rel (0) target = $region29
    $region28: #{tpu_custom_call.1} parent=1 // pred_region
      %40 = vsyncadd [#allocation5], 0
      %s41 = sshll.u32 %s6, 4
      %s42 = int_to_ptr.hbm [resolvable:$true] %s41
      %s43 = sshll.u32 [#allocation4], 4
      %s44 = int_to_ptr.vmem [resolvable:$true] %s43
      %49 = dma.hbm_to_vmem [thread:$0]  %s42, 1024, %s44, [#allocation5], 128, 128, 8
    $region29: #{tpu_custom_call.1} parent=1 // pred_fallthru
      _
    // Predicated region
    $region30: #{tpu_custom_call.1} parent=1 // pred_check
      _
    $region31: #{tpu_custom_call.1} parent=1 // pred_check_branch
      %51 = sbr.rel (0) target = $region33
    $region32: #{tpu_custom_call.1} parent=1 // pred_region
      %53 = vsyncadd [#allocation8], 0
      %s54 = sshll.u32 %s7, 4
      %s55 = int_to_ptr.hbm [resolvable:$true] %s54
      %s56 = sshll.u32 [#allocation7], 4
      %s57 = int_to_ptr.vmem [resolvable:$true] %s56
      %62 = dma.hbm_to_vmem [thread:$0]  %s55, 1024, %s57, [#allocation8], 128, 128, 8
    $region33: #{tpu_custom_call.1} parent=1 // pred_fallthru
      _
    // Predicated region
    $region34: #{tpu_custom_call.1} parent=1 // pred_check
      _
    $region35: #{tpu_custom_call.1} parent=1 // pred_check_branch
      %64 = sbr.rel (0) target = $region37
    $region36: #{tpu_custom_call.1} parent=1 // pred_region
      %66 = vsyncadd [#allocation8], 0
      %s67 = sshll.u32 %s8, 4
      %s68 = int_to_ptr.hbm [resolvable:$true] %s67
      %s69 = sshll.u32 [#allocation9], 4
      %s70 = int_to_ptr.vmem [resolvable:$true] %s69
      %75 = dma.hbm_to_vmem [thread:$0]  %s68, 256, %s70, [#allocation8], 128, 128, 8
    $region37: #{tpu_custom_call.1} parent=1 // pred_fallthru
      _
    // Predicated region
    $region38: #{tpu_custom_call.1} parent=1 // pred_check
      _
    $region39: #{tpu_custom_call.1} parent=1 // pred_check_branch
      %77 = sbr.rel (0) target = $region41
    $region40: #{tpu_custom_call.1} parent=1 // pred_region
      _
    $region41: #{tpu_custom_call.1} parent=1 // pred_fallthru
      _
    // Predicated region
    $region42: #{tpu_custom_call.1} parent=1 // pred_check
      _
    $region43: #{tpu_custom_call.1} parent=1 // pred_check_branch
      %79 = sbr.rel (0) target = $region45
    $region44: #{tpu_custom_call.1} parent=1 // pred_region
      %81 = dma.done [#allocation5], 1024
    $region45: #{tpu_custom_call.1} parent=1 // pred_fallthru
      _
    // Predicated region
    $region46: #{tpu_custom_call.1} parent=1 // pred_check
      _
    $region47: #{tpu_custom_call.1} parent=1 // pred_check_branch
      %83 = sbr.rel (0) target = $region49
    $region48: #{tpu_custom_call.1} parent=1 // pred_region
      %85 = dma.done [#allocation8], 1024
    $region49: #{tpu_custom_call.1} parent=1 // pred_fallthru
      _
    // Predicated region
    $region50: #{tpu_custom_call.1} parent=1 // pred_check
      _
    $region51: #{tpu_custom_call.1} parent=1 // pred_check_branch
      %87 = sbr.rel (0) target = $region53
    $region52: #{tpu_custom_call.1} parent=1 // pred_region
      %89 = dma.done [#allocation8], 256
    $region53: #{tpu_custom_call.1} parent=1 // pred_fallthru
      _
    %v91 = vld [vmem:[%s0] sm:$0xf]
    %v92 = vld [vmem:[%s1] sm:$0xf]
    %v93 = vld [vmem:[%s2] sm:$0xf]
    %v94 = vrot.slane %v92, 4
    %vm95 = vcmask 1043456
    %v96 = vsel %vm95, %v91, %v94
    %v97 = vld [vmem:[%s3] sm:$0xf]
    %v98 = vld [vmem:[%s4] sm:$0xf]
    %v99 = vld [vmem:[%s5] sm:$0xf]
    %v101 = vrot.slane %v98, 4
    %v103 = vsel %vm95, %v97, %v101
    %v104 = vlaneseq
    %v105 = vand.u32 %v104, 127
    %v106 = vperm.slane %v96, 0
    %v107 = vlaneseq
    %v108 = vshrl.u32 %v107, 7
    %110 = vset.pattern.permute.xlu0 %v108
    %111 = vperm.xlu0 %110, %v106
    %v112 = vpop.permute.xlu0 %111
    %v113 = vperm.slane %v96, 1
    %v114 = vlaneseq
    %v115 = vshrl.u32 %v114, 7
    %117 = vset.pattern.permute.xlu0 %v115
    %118 = vperm.xlu0 %117, %v113
    %v119 = vpop.permute.xlu0 %118
    %v120 = vperm.slane %v96, 2
    %v121 = vlaneseq
    %v122 = vshrl.u32 %v121, 7
    %124 = vset.pattern.permute.xlu0 %v122
    %125 = vperm.xlu0 %124, %v120
    %v126 = vpop.permute.xlu0 %125
    %v127 = vperm.slane %v96, 3
    %v128 = vlaneseq
    %v129 = vshrl.u32 %v128, 7
    %131 = vset.pattern.permute.xlu0 %v129
    %132 = vperm.xlu0 %131, %v127
    %v133 = vpop.permute.xlu0 %132
    %v134 = vperm.slane %v96, 4
    %v135 = vlaneseq
    %v136 = vshrl.u32 %v135, 7
    %138 = vset.pattern.permute.xlu0 %v136
    %139 = vperm.xlu0 %138, %v134
    %v140 = vpop.permute.xlu0 %139
    %v141 = vperm.slane %v96, 5
    %v142 = vlaneseq
    %v143 = vshrl.u32 %v142, 7
    %145 = vset.pattern.permute.xlu0 %v143
    %146 = vperm.xlu0 %145, %v141
    %v147 = vpop.permute.xlu0 %146
    %v148 = vperm.slane %v96, 6
    %v149 = vlaneseq
    %v150 = vshrl.u32 %v149, 7
    %152 = vset.pattern.permute.xlu0 %v150
    %153 = vperm.xlu0 %152, %v148
    %v154 = vpop.permute.xlu0 %153
    %v155 = vperm.slane %v96, 7
    %v156 = vlaneseq
    %v157 = vshrl.u32 %v156, 7
    %159 = vset.pattern.permute.xlu0 %v157
    %160 = vperm.xlu0 %159, %v155
    %v161 = vpop.permute.xlu0 %160
    %v162 = vperm.slane %v93, 0
    %v163 = vlaneseq
    %v164 = vshrl.u32 %v163, 7
    %166 = vset.pattern.permute.xlu0 %v164
    %167 = vperm.xlu0 %166, %v162
    %v168 = vpop.permute.xlu0 %167
    %v169 = vperm.slane %v93, 1
    %v170 = vlaneseq
    %v171 = vshrl.u32 %v170, 7
    %173 = vset.pattern.permute.xlu0 %v171
    %174 = vperm.xlu0 %173, %v169
    %v175 = vpop.permute.xlu0 %174
    %v176 = vperm.slane %v93, 2
    %v177 = vlaneseq
    %v178 = vshrl.u32 %v177, 7
    %180 = vset.pattern.permute.xlu0 %v178
    %181 = vperm.xlu0 %180, %v176
    %v182 = vpop.permute.xlu0 %181
    %v183 = vperm.slane %v93, 3
    %v184 = vlaneseq
    %v185 = vshrl.u32 %v184, 7
    %187 = vset.pattern.permute.xlu0 %v185
    %188 = vperm.xlu0 %187, %v183
    %v189 = vpop.permute.xlu0 %188
    %vm190 = vcmp.eq.s32.totalorder %v112, %v105
    %vm191 = vcmp.eq.s32.totalorder %v119, %v105
    %vm192 = vcmp.eq.s32.totalorder %v126, %v105
    %vm193 = vcmp.eq.s32.totalorder %v133, %v105
    %vm194 = vcmp.eq.s32.totalorder %v140, %v105
    %vm195 = vcmp.eq.s32.totalorder %v147, %v105
    %vm196 = vcmp.eq.s32.totalorder %v154, %v105
    %vm197 = vcmp.eq.s32.totalorder %v161, %v105
    %vm198 = vcmp.eq.s32.totalorder %v168, %v105
    %vm199 = vcmp.eq.s32.totalorder %v175, %v105
    %vm200 = vcmp.eq.s32.totalorder %v182, %v105
    %vm201 = vcmp.eq.s32.totalorder %v189, %v105
    %v202 = vperm.slane %v103, 0
    %v203 = vlaneseq
    %v204 = vshrl.u32 %v203, 7
    %206 = vset.pattern.permute.xlu0 %v204
    %207 = vperm.xlu0 %206, %v202
    %v208 = vpop.permute.xlu0 %207
    %v209 = vperm.slane %v103, 1
    %v210 = vlaneseq
    %v211 = vshrl.u32 %v210, 7
    %213 = vset.pattern.permute.xlu0 %v211
    %214 = vperm.xlu0 %213, %v209
    %v215 = vpop.permute.xlu0 %214
    %v216 = vperm.slane %v103, 2
    %v217 = vlaneseq
    %v218 = vshrl.u32 %v217, 7
    %220 = vset.pattern.permute.xlu0 %v218
    %221 = vperm.xlu0 %220, %v216
    %v222 = vpop.permute.xlu0 %221
    %v223 = vperm.slane %v103, 3
    %v224 = vlaneseq
    %v225 = vshrl.u32 %v224, 7
    %227 = vset.pattern.permute.xlu0 %v225
    %228 = vperm.xlu0 %227, %v223
    %v229 = vpop.permute.xlu0 %228
    %v230 = vperm.slane %v103, 4
    %v231 = vlaneseq
    %v232 = vshrl.u32 %v231, 7
    %234 = vset.pattern.permute.xlu0 %v232
    %235 = vperm.xlu0 %234, %v230
    %v236 = vpop.permute.xlu0 %235
    %v237 = vperm.slane %v103, 5
    %v238 = vlaneseq
    %v239 = vshrl.u32 %v238, 7
    %241 = vset.pattern.permute.xlu0 %v239
    %242 = vperm.xlu0 %241, %v237
    %v243 = vpop.permute.xlu0 %242
    %v244 = vperm.slane %v103, 6
    %v245 = vlaneseq
    %v246 = vshrl.u32 %v245, 7
    %248 = vset.pattern.permute.xlu0 %v246
    %249 = vperm.xlu0 %248, %v244
    %v250 = vpop.permute.xlu0 %249
    %v251 = vperm.slane %v103, 7
    %v252 = vlaneseq
    %v253 = vshrl.u32 %v252, 7
    %255 = vset.pattern.permute.xlu0 %v253
    %256 = vperm.xlu0 %255, %v251
    %v257 = vpop.permute.xlu0 %256
    %v258 = vperm.slane %v99, 0
    %v259 = vlaneseq
    %v260 = vshrl.u32 %v259, 7
    %262 = vset.pattern.permute.xlu0 %v260
    %263 = vperm.xlu0 %262, %v258
    %v264 = vpop.permute.xlu0 %263
    %v265 = vperm.slane %v99, 1
    %v266 = vlaneseq
    %v267 = vshrl.u32 %v266, 7
    %269 = vset.pattern.permute.xlu0 %v267
    %270 = vperm.xlu0 %269, %v265
    %v271 = vpop.permute.xlu0 %270
    %v272 = vperm.slane %v99, 2
    %v273 = vlaneseq
    %v274 = vshrl.u32 %v273, 7
    %276 = vset.pattern.permute.xlu0 %v274
    %277 = vperm.xlu0 %276, %v272
    %v278 = vpop.permute.xlu0 %277
    %v279 = vperm.slane %v99, 3
    %v280 = vlaneseq
    %v281 = vshrl.u32 %v280, 7
    %283 = vset.pattern.permute.xlu0 %v281
    %284 = vperm.xlu0 %283, %v279
    %v285 = vpop.permute.xlu0 %284
    %v286 = vsel %vm190, %v208, 0.0
    %v287 = vsel %vm191, %v215, 0.0
    %v288 = vsel %vm192, %v222, 0.0
    %v289 = vsel %vm193, %v229, 0.0
    %v290 = vsel %vm194, %v236, 0.0
    %v291 = vsel %vm195, %v243, 0.0
    %v292 = vsel %vm196, %v250, 0.0
    %v293 = vsel %vm197, %v257, 0.0
    %v294 = vsel %vm198, %v264, 0.0
    %v295 = vsel %vm199, %v271, 0.0
    %v296 = vsel %vm200, %v278, 0.0
    %v297 = vsel %vm201, %v285, 0.0
    %vm298 = vcmask 523264
    %v299 = vsel %vm298, %v286, 0.0
    %v300 = vrot.slane %v299, 4
    %v301 = vadd.f32 %v299, %v300
    %v302 = vrot.slane %v301, 2
    %v303 = vadd.f32 %v301, %v302
    %v304 = vrot.slane %v303, 1
    %v305 = vadd.f32 %v303, %v304
    %v306 = vsel %vm298, %v287, 0.0
    %v307 = vrot.slane %v306, 4
    %v308 = vadd.f32 %v306, %v307
    %v309 = vrot.slane %v308, 2
    %v310 = vadd.f32 %v308, %v309
    %v311 = vrot.slane %v310, 1
    %v312 = vadd.f32 %v310, %v311
    %v313 = vsel %vm298, %v288, 0.0
    %v314 = vrot.slane %v313, 4
    %v315 = vadd.f32 %v313, %v314
    %v316 = vrot.slane %v315, 2
    %v317 = vadd.f32 %v315, %v316
    %v318 = vrot.slane %v317, 1
    %v319 = vadd.f32 %v317, %v318
    %v320 = vsel %vm298, %v289, 0.0
    %v321 = vrot.slane %v320, 4
    %v322 = vadd.f32 %v320, %v321
    %v323 = vrot.slane %v322, 2
    %v324 = vadd.f32 %v322, %v323
    %v325 = vrot.slane %v324, 1
    %v326 = vadd.f32 %v324, %v325
    %v327 = vsel %vm298, %v290, 0.0
    %v328 = vrot.slane %v327, 4
    %v329 = vadd.f32 %v327, %v328
    %v330 = vrot.slane %v329, 2
    %v331 = vadd.f32 %v329, %v330
    %v332 = vrot.slane %v331, 1
    %v333 = vadd.f32 %v331, %v332
    %v334 = vsel %vm298, %v291, 0.0
    %v335 = vrot.slane %v334, 4
    %v336 = vadd.f32 %v334, %v335
    %v337 = vrot.slane %v336, 2
    %v338 = vadd.f32 %v336, %v337
    %v339 = vrot.slane %v338, 1
    %v340 = vadd.f32 %v338, %v339
    %v341 = vsel %vm298, %v292, 0.0
    %v342 = vrot.slane %v341, 4
    %v343 = vadd.f32 %v341, %v342
    %v344 = vrot.slane %v343, 2
    %v345 = vadd.f32 %v343, %v344
    %v346 = vrot.slane %v345, 1
    %v347 = vadd.f32 %v345, %v346
    %v348 = vsel %vm298, %v293, 0.0
    %v349 = vrot.slane %v348, 4
    %v350 = vadd.f32 %v348, %v349
    %v351 = vrot.slane %v350, 2
    %v352 = vadd.f32 %v350, %v351
    %v353 = vrot.slane %v352, 1
    %v354 = vadd.f32 %v352, %v353
    %v355 = vsel %vm298, %v294, 0.0
    %v356 = vrot.slane %v355, 4
    %v357 = vadd.f32 %v355, %v356
    %v358 = vrot.slane %v357, 2
    %v359 = vadd.f32 %v357, %v358
    %v360 = vrot.slane %v359, 1
    %v361 = vadd.f32 %v359, %v360
    %v362 = vsel %vm298, %v295, 0.0
    %v363 = vrot.slane %v362, 4
    %v364 = vadd.f32 %v362, %v363
    %v365 = vrot.slane %v364, 2
    %v366 = vadd.f32 %v364, %v365
    %v367 = vrot.slane %v366, 1
    %v368 = vadd.f32 %v366, %v367
    %v369 = vsel %vm298, %v296, 0.0
    %v370 = vrot.slane %v369, 4
    %v371 = vadd.f32 %v369, %v370
    %v372 = vrot.slane %v371, 2
    %v373 = vadd.f32 %v371, %v372
    %v374 = vrot.slane %v373, 1
    %v375 = vadd.f32 %v373, %v374
    %v376 = vsel %vm298, %v297, 0.0
    %v377 = vrot.slane %v376, 4
    %v378 = vadd.f32 %v376, %v377
    %v379 = vrot.slane %v378, 2
    %v380 = vadd.f32 %v378, %v379
    %v381 = vrot.slane %v380, 1
    %v382 = vadd.f32 %v380, %v381
    %vm383 = vcmask 64512
    %v384 = vsel %vm383, %v103, 0.0
    %385 = vadd.xlane.f32.xlu0 %v384
    %v386 = vpop.xlane.xlu0 %385
    %vm387 = vcmask 60416
    %v388 = vsel %vm387, %v99, 0.0
    %389 = vadd.xlane.f32.xlu0 %v388
    %v390 = vpop.xlane.xlu0 %389
    %v391 = vmax.f32 %v386, 1e-06
    %v392 = vmax.f32 %v390, 1e-06
    %v393 = vrcp.pop %v391
    %v394 = vmul.f32 %v391, %v393
    %v395 = vsub.f32 1.0, %v394
    %v396 = vmul.f32 %v393, %v395
    %v397 = vadd.f32 %v393, %v396
    %vm398 = vweird.f32 %v391
    %vm399 = vweird.f32 %v393
    %vm400 = vmor %vm398, %vm399
    %v401 = vsel %vm400, %v393, %v397
    %v402 = vand.u32 2147483647, %v391
    %vm403 = vcmp.eq.f32.partialorder %v402, 8.507059e+37
    %v404 = vand.u32 %v391, 2147483648
    %v405 = vor.u32 1.1754944e-38, %v404
    %v406 = vsel %vm403, %v405, %v401
    %v407 = vmul.f32 1.0, %v406
    %v408 = vrcp.pop %v392
    %v409 = vmul.f32 %v392, %v408
    %v410 = vsub.f32 1.0, %v409
    %v411 = vmul.f32 %v408, %v410
    %v412 = vadd.f32 %v408, %v411
    %vm413 = vweird.f32 %v392
    %vm414 = vweird.f32 %v408
    %vm415 = vmor %vm413, %vm414
    %v416 = vsel %vm415, %v408, %v412
    %v417 = vand.u32 2147483647, %v392
    %vm418 = vcmp.eq.f32.partialorder %v417, 8.507059e+37
    %v419 = vand.u32 %v392, 2147483648
    %v420 = vor.u32 1.1754944e-38, %v419
    %v421 = vsel %vm418, %v420, %v416
    %v422 = vmul.f32 1.0, %v421
    %v423 = vld [vmem:[#allocation4] sm:$0xff]
    %v424 = vld [vmem:[#allocation4 + $0x8] sm:$0xff]
    %v425 = vld [vmem:[#allocation4 + $0x10] sm:$0xff]
    %v426 = vld [vmem:[#allocation4 + $0x18] sm:$0xff]
    %v427 = vld [vmem:[#allocation4 + $0x20] sm:$0xff]
    %v428 = vld [vmem:[#allocation4 + $0x28] sm:$0xff]
    %v429 = vld [vmem:[#allocation4 + $0x30] sm:$0xff]
    %v430 = vld [vmem:[#allocation4 + $0x38] sm:$0xff]
    %v431 = vld [vmem:[#allocation7] sm:$0xff]
    %v432 = vld [vmem:[#allocation7 + $0x8] sm:$0xff]
    %v433 = vld [vmem:[#allocation7 + $0x10] sm:$0xff]
    %v434 = vld [vmem:[#allocation7 + $0x18] sm:$0xff]
    %v435 = vld [vmem:[#allocation7 + $0x20] sm:$0xff]
    %v436 = vld [vmem:[#allocation7 + $0x28] sm:$0xff]
    %v437 = vld [vmem:[#allocation7 + $0x30] sm:$0xff]
    %v438 = vld [vmem:[#allocation7 + $0x38] sm:$0xff]
    %v439 = vmul.f32 %v423, 0.999
    %v440 = vmul.f32 %v424, 0.999
    %v441 = vmul.f32 %v425, 0.999
    %v442 = vmul.f32 %v426, 0.999
    %v443 = vmul.f32 %v427, 0.999
    %v444 = vmul.f32 %v428, 0.999
    %v445 = vmul.f32 %v429, 0.999
    %v446 = vmul.f32 %v430, 0.999
    %v447 = vmul.f32 %v423, 0.001
    %v448 = vmul.f32 %v424, 0.001
    %v449 = vmul.f32 %v425, 0.001
    %v450 = vmul.f32 %v426, 0.001
    %v451 = vmul.f32 %v427, 0.001
    %v452 = vmul.f32 %v428, 0.001
    %v453 = vmul.f32 %v429, 0.001
    %v454 = vmul.f32 %v430, 0.001
    %463 = vrot.lane.b32.xlu0 %v447, 32
    %v464 = vpop.permute.xlu0 %463
    %465 = vrot.lane.b32.xlu0 %v448, 32
    %v466 = vpop.permute.xlu0 %465
    %467 = vrot.lane.b32.xlu0 %v449, 32
    %v468 = vpop.permute.xlu0 %467
    %469 = vrot.lane.b32.xlu0 %v450, 32
    %v470 = vpop.permute.xlu0 %469
    %471 = vrot.lane.b32.xlu0 %v451, 32
    %v472 = vpop.permute.xlu0 %471
    %473 = vrot.lane.b32.xlu0 %v452, 32
    %v474 = vpop.permute.xlu0 %473
    %475 = vrot.lane.b32.xlu0 %v453, 32
    %v476 = vpop.permute.xlu0 %475
    %477 = vrot.lane.b32.xlu0 %v454, 32
    %v478 = vpop.permute.xlu0 %477
    %v487 = vadd.f32 %v439, %v464
    %v488 = vadd.f32 %v440, %v466
    %v489 = vadd.f32 %v441, %v468
    %v490 = vadd.f32 %v442, %v470
    %v491 = vadd.f32 %v443, %v472
    %v492 = vadd.f32 %v444, %v474
    %v493 = vadd.f32 %v445, %v476
    %v494 = vadd.f32 %v446, %v478
    %vm495 = vcmask 261120
    %v496 = vsel %vm495, %v423, %v487
    %v497 = vsel %vm495, %v424, %v488
    %v498 = vsel %vm495, %v425, %v489
    %v499 = vsel %vm495, %v426, %v490
    %v500 = vsel %vm495, %v427, %v491
    %v501 = vsel %vm495, %v428, %v492
    %v502 = vsel %vm495, %v429, %v493
    %v503 = vsel %vm495, %v430, %v494
    %v504 = vmul.f32 %v435, 0.999
    %v505 = vmul.f32 %v436, 0.999
    %v506 = vmul.f32 %v437, 0.999
    %v507 = vmul.f32 %v438, 0.999
    %v508 = vmul.f32 %v431, 0.001
    %v509 = vmul.f32 %v432, 0.001
    %v510 = vmul.f32 %v433, 0.001
    %v511 = vmul.f32 %v434, 0.001
    %516 = vrot.lane.b32.xlu0 %v508, 32
    %v517 = vpop.permute.xlu0 %516
    %518 = vrot.lane.b32.xlu0 %v509, 32
    %v519 = vpop.permute.xlu0 %518
    %520 = vrot.lane.b32.xlu0 %v510, 32
    %v521 = vpop.permute.xlu0 %520
    %522 = vrot.lane.b32.xlu0 %v511, 32
    %v523 = vpop.permute.xlu0 %522
    %v528 = vadd.f32 %v504, %v517
    %v529 = vadd.f32 %v505, %v519
    %v530 = vadd.f32 %v506, %v521
    %v531 = vadd.f32 %v507, %v523
    %v532 = vsel %vm495, %v431, 0.0
    %v533 = vsel %vm495, %v432, 0.0
    %v534 = vsel %vm495, %v433, 0.0
    %v535 = vsel %vm495, %v434, 0.0
    %v536 = vsel %vm495, 0.0, %v528
    %v537 = vsel %vm495, 0.0, %v529
    %v538 = vsel %vm495, 0.0, %v530
    %v539 = vsel %vm495, 0.0, %v531
    %540 = vst.msk [vmem:[#allocation11] sm:$0xff] %vm298, %v496
    %541 = vst.msk [vmem:[#allocation11 + $0x8] sm:$0xff] %vm298, %v497
    %542 = vst.msk [vmem:[#allocation11 + $0x10] sm:$0xff] %vm298, %v498
    %543 = vst.msk [vmem:[#allocation11 + $0x18] sm:$0xff] %vm298, %v499
    %544 = vst.msk [vmem:[#allocation11 + $0x20] sm:$0xff] %vm298, %v500
    %545 = vst.msk [vmem:[#allocation11 + $0x28] sm:$0xff] %vm298, %v501
    %546 = vst.msk [vmem:[#allocation11 + $0x30] sm:$0xff] %vm298, %v502
    %547 = vst.msk [vmem:[#allocation11 + $0x38] sm:$0xff] %vm298, %v503
    %548 = vst.msk [vmem:[#allocation13] sm:$0xff] %vm298, %v532
    %549 = vst.msk [vmem:[#allocation13 + $0x8] sm:$0xff] %vm298, %v533
    %550 = vst.msk [vmem:[#allocation13 + $0x10] sm:$0xff] %vm298, %v534
    %551 = vst.msk [vmem:[#allocation13 + $0x18] sm:$0xff] %vm298, %v535
    %552 = vst.msk [vmem:[#allocation13 + $0x20] sm:$0xff] %vm298, %v536
    %553 = vst.msk [vmem:[#allocation13 + $0x28] sm:$0xff] %vm298, %v537
    %554 = vst.msk [vmem:[#allocation13 + $0x30] sm:$0xff] %vm298, %v538
    %555 = vst.msk [vmem:[#allocation13 + $0x38] sm:$0xff] %vm298, %v539
    %v556 = vpack.c.bf16 %v305, %v305
    %v557 = vpack.c.bf16 %v312, %v312
    %v558 = vpack.c.bf16 %v319, %v319
    %v559 = vpack.c.bf16 %v326, %v326
    %v560 = vpack.c.bf16 %v333, %v333
    %v561 = vpack.c.bf16 %v340, %v340
    %v562 = vpack.c.bf16 %v347, %v347
    %v563 = vpack.c.bf16 %v354, %v354
    %v564 = vpack.c.bf16 %v361, %v361
    %v565 = vpack.c.bf16 %v368, %v368
    %v566 = vpack.c.bf16 %v375, %v375
    %v567 = vpack.c.bf16 %v382, %v382
    %v568 = vpack.c.bf16 %v497, %v496
    %v569 = vpack.c.bf16 %v499, %v498
    %v570 = vpack.c.bf16 %v501, %v500
    %v571 = vpack.c.bf16 %v503, %v502
    %v584 = vunpack.c.l.b16 %v556
    %v585 = vunpack.c.l.b16 %v557
    %v586 = vunpack.c.l.b16 %v558
    %v587 = vunpack.c.l.b16 %v559
    %v588 = vunpack.c.l.b16 %v560
    %v589 = vunpack.c.l.b16 %v561
    %v590 = vunpack.c.l.b16 %v562
    %v591 = vunpack.c.l.b16 %v563
    %v592 = vunpack.c.l.b16 %v564
    %v593 = vunpack.c.l.b16 %v565
    %v594 = vunpack.c.l.b16 %v566
    %v595 = vunpack.c.l.b16 %v567
    %vm596 = vcmask 1041409
    %v597 = vsel %vm596, %v585, %v584
    %vm598 = vcmask 1042434
    %v599 = vsel %vm598, %v586, %v597
    %vm600 = vcmask 1043459
    %v601 = vsel %vm600, %v587, %v599
    %vm602 = vcmask 1044484
    %v603 = vsel %vm602, %v588, %v601
    %vm604 = vcmask 1045509
    %v605 = vsel %vm604, %v589, %v603
    %vm606 = vcmask 1046534
    %v607 = vsel %vm606, %v590, %v605
    %vm608 = vcmask 1047559
    %v609 = vsel %vm608, %v591, %v607
    %v610 = vsel %vm596, %v593, %v592
    %v611 = vsel %vm598, %v594, %v610
    %v612 = vsel %vm600, %v595, %v611
    %v613 = vpack.c.b16 %v612, %v609
    %v615 = vsel %vm298, %v613, 0
    %617 = vmatpush.bf16.msra.mxu0 0
    %618 = vmatpush.bf16.msra.mxu0 0
    %619 = vmatpush.bf16.msra.mxu0 0
    %620 = vmatpush.bf16.msra.mxu0 0
    %621 = vmatpush.bf16.msra.mxu0 %v571
    %622 = vmatpush.bf16.msra.mxu0 %v570
    %623 = vmatpush.bf16.msra.mxu0 %v569
    %624 = vmatpush.bf16.msra.mxu0 %v568
    %625 = vmatmul.bf16.gmra.mxu0 %v615
    %v626 = vpop.f32.mrf.mxu0
    %v627 = vadd.f32 0.0, %v626
    %v628 = vpop.f32.mrf.mxu0
    %v629 = vadd.f32 0.0, %v628
    %630 = vdwg.mxu0
    %v631 = vmul.f32 %v627, %v407
    %v632 = vmul.f32 %v629, %v422
    %v633 = vpack.c.bf16 %v632, %v631
    %v634 = vpack.c.bf16 %v533, %v532
    %v635 = vpack.c.bf16 %v535, %v534
    %v636 = vpack.c.bf16 %v537, %v536
    %v637 = vpack.c.bf16 %v539, %v538
    %v639 = vsel %vm298, %v633, 0
    %641 = vmatpush.bf16.msra.mxu0 0
    %642 = vmatpush.bf16.msra.mxu0 0
    %643 = vmatpush.bf16.msra.mxu0 0
    %644 = vmatpush.bf16.msra.mxu0 0
    %645 = vmatpush.bf16.msra.mxu0 %v637
    %646 = vmatpush.bf16.msra.mxu0 %v636
    %647 = vmatpush.bf16.msra.mxu0 %v635
    %648 = vmatpush.bf16.msra.mxu0 %v634
    %649 = vmatmul.bf16.gmra.mxu0 %v639
    %v650 = vpop.f32.mrf.mxu0
    %v651 = vadd.f32 0.0, %v650
    %v652 = vpop.f32.mrf.mxu0
    %v653 = vadd.f32 0.0, %v652
    %654 = vdwg.mxu0
    %vm655 = vcmp.lt.s32.totalorder %v105, 32
    %v656 = vmul.f32 %v651, %v651
    %v657 = vmul.f32 %v653, %v653
    %v658 = vsel %vm655, %v656, 0.0
    %v659 = vsel %vm655, %v657, 0.0
    %v660 = vsel %vm298, %v658, 0.0
    %661 = vadd.xlane.f32.xlu0 %v660
    %v662 = vpop.xlane.xlu0 %661
    %vm663 = vcmask 519168
    %v664 = vsel %vm663, %v659, 0.0
    %665 = vadd.xlane.f32.xlu0 %v664
    %v666 = vpop.xlane.xlu0 %665
    %v667 = vadd.f32 %v662, 1e-12
    %v668 = vadd.f32 %v666, 1e-12
    %v669 = vrsqrt.pop %v667
    %v670 = vmul.f32 %v669, %v667
    %v671 = vmul.f32 %v670, %v669
    %v672 = vmul.f32 0.5, %v671
    %v673 = vsub.f32 1.5, %v672
    %v674 = vmul.f32 %v669, %v673
    %vm675 = vweird.f32 %v667
    %vm676 = vweird.f32 %v669
    %vm677 = vmor %vm675, %vm676
    %v678 = vsel %vm677, %v669, %v674
    %v679 = vrsqrt.pop %v668
    %v680 = vmul.f32 %v679, %v668
    %v681 = vmul.f32 %v680, %v679
    %v682 = vmul.f32 0.5, %v681
    %v683 = vsub.f32 1.5, %v682
    %v684 = vmul.f32 %v679, %v683
    %vm685 = vweird.f32 %v668
    %vm686 = vweird.f32 %v679
    %vm687 = vmor %vm685, %vm686
    %v688 = vsel %vm687, %v679, %v684
    %v689 = vsel %vm655, 0.0, %v656
    %v690 = vsel %vm655, 0.0, %v657
    %v691 = vsel %vm298, %v689, 0.0
    %692 = vadd.xlane.f32.xlu0 %v691
    %v693 = vpop.xlane.xlu0 %692
    %v694 = vsel %vm663, %v690, 0.0
    %695 = vadd.xlane.f32.xlu0 %v694
    %v696 = vpop.xlane.xlu0 %695
    %v697 = vadd.f32 %v693, 1e-12
    %v698 = vadd.f32 %v696, 1e-12
    %v699 = vrsqrt.pop %v697
    %v700 = vmul.f32 %v699, %v697
    %v701 = vmul.f32 %v700, %v699
    %v702 = vmul.f32 0.5, %v701
    %v703 = vsub.f32 1.5, %v702
    %v704 = vmul.f32 %v699, %v703
    %vm705 = vweird.f32 %v697
    %vm706 = vweird.f32 %v699
    %vm707 = vmor %vm705, %vm706
    %v708 = vsel %vm707, %v699, %v704
    %v709 = vrsqrt.pop %v698
    %v710 = vmul.f32 %v709, %v698
    %v711 = vmul.f32 %v710, %v709
    %v712 = vmul.f32 0.5, %v711
    %v713 = vsub.f32 1.5, %v712
    %v714 = vmul.f32 %v709, %v713
    %vm715 = vweird.f32 %v698
    %vm716 = vweird.f32 %v709
    %vm717 = vmor %vm715, %vm716
    %v718 = vsel %vm717, %v709, %v714
    %v719 = vsel %vm655, %v678, %v708
    %v720 = vsel %vm655, %v688, %v718
    %v721 = vmul.f32 %v651, %v719
    %v722 = vmul.f32 %v653, %v720
    %vm723 = vcmask 257024
    %v724 = vsel %vm723, %v721, -inf
    %725 = vmax.xlane.f32.xlu0 %v724
    %v726 = vpop.xlane.xlu0 %725
    %v727 = vsub.f32 %v721, %v726
    %v728 = vmul.f32 %v727, 1.442695
    %v729 = vpow.pop %v728
    %v730 = vsel %vm723, %v729, 0.0
    %731 = vadd.xlane.f32.xlu0 %v730
    %v732 = vpop.xlane.xlu0 %731
    %v733 = vlog2.pop %v732
    %v734 = vmul.f32 %v733, 0.6931472
    %v735 = vsub.f32 %v727, %v734
    %vm736 = vcmask 523524
    %v737 = vsel %vm736, %v721, -inf
    %738 = vmax.xlane.f32.xlu0 %v737
    %v739 = vpop.xlane.xlu0 %738
    %v740 = vsub.f32 %v721, %v739
    %v741 = vmul.f32 %v740, 1.442695
    %v742 = vpow.pop %v741
    %744 = vrot.lane.b32.xlu0 %v742, 96
    %v745 = vpop.permute.xlu0 %744
    %vm747 = vcmask 261124
    %v748 = vsel %vm747, %v745, 0.0
    %749 = vadd.xlane.f32.xlu0 %v748
    %v750 = vpop.xlane.xlu0 %749
    %v751 = vlog2.pop %v750
    %v752 = vmul.f32 %v751, 0.6931472
    %v753 = vsub.f32 %v740, %v752
    %v754 = vmul.f32 %v753, 1.442695
    %v755 = vpow.pop %v754
    %v757 = vrot.slane %v735, 4
    %758 = vrot.lane.b32.xlu0 %v757, 32
    %v759 = vpop.permute.xlu0 %758
    %v761 = vsub.f32 %v753, %v759
    %v762 = vmul.f32 %v755, %v761
    %764 = vrot.lane.b32.xlu0 %v762, 96
    %v765 = vpop.permute.xlu0 %764
    %v767 = vsel %vm747, %v765, 0.0
    %768 = vadd.xlane.f32.xlu0 %v767
    %v769 = vpop.xlane.xlu0 %768
    %v771 = vrot.slane %v769, 4
    %v773 = vsel %vm95, %v771, 0.0
    %v774 = vrot.slane %v773, 4
    %v775 = vadd.f32 %v773, %v774
    %v776 = vrot.slane %v775, 2
    %v777 = vadd.f32 %v775, %v776
    %v778 = vrot.slane %v777, 1
    %v779 = vadd.f32 %v777, %v778
    %v780 = vmul.f32 %v779, 0.25
    %v782 = vrot.slane %v721, 4
    %v784 = vmul.f32 %v721, %v782
    %v785 = vsel %vm723, %v784, 0.0
    %786 = vadd.xlane.f32.xlu0 %v785
    %v787 = vpop.xlane.xlu0 %786
    %v788 = vmul.f32 %v787, 20.0
    %v789 = vmul.f32 %v721, %v722
    %v790 = vsel %vm723, %v789, 0.0
    %791 = vadd.xlane.f32.xlu0 %v790
    %v792 = vpop.xlane.xlu0 %791
    %v793 = vmul.f32 %v792, 20.0
    %795 = vrot.lane.b32.xlu0 %v784, 96
    %v796 = vpop.permute.xlu0 %795
    %v798 = vsel %vm723, %v796, 0.0
    %799 = vadd.xlane.f32.xlu0 %v798
    %v800 = vpop.xlane.xlu0 %799
    %v801 = vmul.f32 %v800, 20.0
    %803 = vrot.lane.b32.xlu0 %v789, 96
    %v804 = vpop.permute.xlu0 %803
    %v806 = vsel %vm723, %v804, 0.0
    %807 = vadd.xlane.f32.xlu0 %v806
    %v808 = vpop.xlane.xlu0 %807
    %v809 = vmul.f32 %v808, 20.0
    %v810 = vsub.f32 %v788, %v793
    %v811 = vsub.f32 %v801, %v809
    %v812 = vsub.f32 %v810, %v811
    %v813 = vmul.f32 %v812, 0.3
    %v814 = vmax.f32 %v813, 0.0
    %v815 = vand.u32 2147483647, %v813
    %v816 = vsub.f32 0.0, %v815
    %v817 = vmul.f32 %v816, 1.442695
    %v818 = vpow.pop %v817
    %v819 = vadd.f32 %v818, 1.0
    %v820 = vlog2.pop %v819
    %v821 = vmul.f32 %v820, 0.6931472
    %v822 = vadd.f32 %v814, %v821
    %v823 = vmul.f32 %v813, 0.9
    %v824 = vsub.f32 %v822, %v823
    %v825 = vsel %vm95, %v824, 0.0
    %v826 = vrot.slane %v825, 4
    %v827 = vadd.f32 %v825, %v826
    %v828 = vrot.slane %v827, 2
    %v829 = vadd.f32 %v827, %v828
    %v830 = vrot.slane %v829, 1
    %v831 = vadd.f32 %v829, %v830
    %v832 = vmul.f32 %v831, 0.25
    %833 = vst.msk [vmem:[#allocation2] sm:$0xff] %vm495, 0.0
    %834 = vst.msk [vmem:[#allocation2 + $0x8] sm:$0xff] %vm495, 0.0
    %835 = vst.msk [vmem:[#allocation2 + $0x10] sm:$0xff] %vm495, 0.0
    %836 = vst.msk [vmem:[#allocation2 + $0x18] sm:$0xff] %vm495, 0.0
    %837 = vst.msk [vmem:[#allocation2 + $0x20] sm:$0xff] %vm495, 0.0
    %838 = vst.msk [vmem:[#allocation2 + $0x28] sm:$0xff] %vm495, 0.0
    %839 = vst.msk [vmem:[#allocation2 + $0x30] sm:$0xff] %vm495, 0.0
    %840 = vst.msk [vmem:[#allocation2 + $0x38] sm:$0xff] %vm495, 0.0
    %841 = vst.msk [vmem:[#allocation2 + $0x40] sm:$0xff] %vm495, 0.0
    %842 = vst.msk [vmem:[#allocation2 + $0x48] sm:$0xff] %vm495, 0.0
    %843 = vst.msk [vmem:[#allocation2 + $0x50] sm:$0xff] %vm495, 0.0
    %844 = vst.msk [vmem:[#allocation2 + $0x58] sm:$0xff] %vm495, 0.0
    %845 = vst.msk [vmem:[#allocation2 + $0x60] sm:$0xff] %vm495, 0.0
    %846 = vst.msk [vmem:[#allocation2 + $0x68] sm:$0xff] %vm495, 0.0
    %847 = vst.msk [vmem:[#allocation2 + $0x70] sm:$0xff] %vm495, 0.0
    %848 = vst.msk [vmem:[#allocation2 + $0x78] sm:$0xff] %vm495, 0.0
    %850 = vrot.lane.b32.xlu0 %v721, 96
    %v851 = vpop.permute.xlu0 %850
    %852 = vrot.lane.b32.xlu0 %v722, 96
    %v853 = vpop.permute.xlu0 %852
    %856 = vst.msk [vmem:[#allocation2 - $0x4] sm:$0xf0] %vm747, %v851
    %857 = vst.msk [vmem:[#allocation2 + $0x4] sm:$0xf] %vm723, %v853
    %v858 = vld [vmem:[#allocation9] sm:$0xff]
    %v859 = vld [vmem:[#allocation9 + $0x8] sm:$0xff]
    %860 = vst.msk [vmem:[#allocation2 + $0x8] sm:$0xff] %vm495, %v858
    %861 = vst.msk [vmem:[#allocation2 + $0x10] sm:$0xff] %vm495, %v859
    %v862 = vpack.c.bf16 %v721, %v721
    %v863 = vld [vmem:[#allocation2] sm:$0xff]
    %v864 = vld [vmem:[#allocation2 + $0x8] sm:$0xff]
    %v865 = vld [vmem:[#allocation2 + $0x10] sm:$0xff]
    %v866 = vld [vmem:[#allocation2 + $0x18] sm:$0xff]
    %v867 = vld [vmem:[#allocation2 + $0x20] sm:$0xff]
    %v868 = vld [vmem:[#allocation2 + $0x28] sm:$0xff]
    %v869 = vld [vmem:[#allocation2 + $0x30] sm:$0xff]
    %v870 = vld [vmem:[#allocation2 + $0x38] sm:$0xff]
    %v871 = vld [vmem:[#allocation2 + $0x40] sm:$0xff]
    %v872 = vld [vmem:[#allocation2 + $0x48] sm:$0xff]
    %v873 = vld [vmem:[#allocation2 + $0x50] sm:$0xff]
    %v874 = vld [vmem:[#allocation2 + $0x58] sm:$0xff]
    %v875 = vld [vmem:[#allocation2 + $0x60] sm:$0xff]
    %v876 = vld [vmem:[#allocation2 + $0x68] sm:$0xff]
    %v877 = vld [vmem:[#allocation2 + $0x70] sm:$0xff]
    %v878 = vld [vmem:[#allocation2 + $0x78] sm:$0xff]
    %v879 = vpack.c.bf16 %v864, %v863
    %v880 = vpack.c.bf16 %v866, %v865
    %v881 = vpack.c.bf16 %v868, %v867
    %v882 = vpack.c.bf16 %v870, %v869
    %v883 = vpack.c.bf16 %v872, %v871
    %v884 = vpack.c.bf16 %v874, %v873
    %v885 = vpack.c.bf16 %v876, %v875
    %v886 = vpack.c.bf16 %v878, %v877
    %v888 = vsel %vm495, %v862, 0
    %v891 = vsel %vm495, %v879, 0
    %v894 = vsel %vm495, %v880, 0
    %v897 = vsel %vm495, %v881, 0
    %v900 = vsel %vm495, %v882, 0
    %v903 = vsel %vm495, %v883, 0
    %v906 = vsel %vm495, %v884, 0
    %v909 = vsel %vm495, %v885, 0
    %v912 = vsel %vm495, %v886, 0
    %914 = vmatpush.bf16.xpose.msra.mxu0 %v912
    %915 = vmatpush.bf16.xpose.msra.mxu0 %v909
    %916 = vmatpush.bf16.xpose.msra.mxu0 %v906
    %917 = vmatpush.bf16.xpose.msra.mxu0 %v903
    %918 = vmatpush.bf16.xpose.msra.mxu0 %v900
    %919 = vmatpush.bf16.xpose.msra.mxu0 %v897
    %920 = vmatpush.bf16.xpose.msra.mxu0 %v894
    %921 = vmatpush.bf16.xpose.msra.mxu0 %v891
    %922 = vmatmul.bf16.gmra.mxu0 %v888
    %v923 = vpop.f32.mrf.mxu0
    %v924 = vadd.f32 0.0, %v923
    %v925 = vpop.f32.mrf.mxu0
    %926 = vdwg.mxu0
    %v927 = vlaneseq
    %v928 = vshrl.u32 %v927, 7
    %vm929 = vcmp.eq.s32.totalorder %v105, %v928
    %v930 = vadd.s32 %v928, 4
    %vm931 = vcmp.eq.s32.totalorder %v105, %v930
    %vm932 = vcmp.ge.s32.totalorder %v105, 24
    %vm933 = vmor %vm931, %vm932
    %v934 = vsel %vm933, -1e+30, %v924
    %v935 = vsel %vm95, %v934, -inf
    %936 = vmax.xlane.f32.xlu0 %v935
    %v937 = vpop.xlane.xlu0 %936
    %v938 = vsub.f32 %v934, %v937
    %v939 = vmul.f32 %v938, 1.442695
    %v940 = vpow.pop %v939
    %v941 = vsel %vm95, %v940, 0.0
    %942 = vadd.xlane.f32.xlu0 %v941
    %v943 = vpop.xlane.xlu0 %942
    %v944 = vlog2.pop %v943
    %v945 = vmul.f32 %v944, 0.6931472
    %v946 = vadd.f32 %v937, %v945
    %v947 = vsel %vm929, %v924, 0.0
    %v948 = vsel %vm95, %v947, 0.0
    %949 = vadd.xlane.f32.xlu0 %v948
    %v950 = vpop.xlane.xlu0 %949
    %v951 = vsel %vm933, 0.0, %v924
    %v952 = vsel %vm95, %v951, 0.0
    %953 = vadd.xlane.f32.xlu0 %v952
    %v954 = vpop.xlane.xlu0 %953
    %v955 = vsub.f32 %v946, %v950
    %v956 = vmul.f32 %v955, 0.9
    %v957 = vmul.f32 %v946, 23.0
    %v958 = vsub.f32 %v957, %v954
    %v959 = vrcp.pop 23.0
    %v960 = vmul.f32 23.0, %v959
    %v961 = vsub.f32 1.0, %v960
    %v962 = vmul.f32 %v959, %v961
    %v963 = vadd.f32 %v959, %v962
    %vm964 = vweird.f32 %v959
    %v965 = vsel %vm964, %v959, %v963
    %v966 = vmul.f32 %v958, %v965
    %v967 = vmul.f32 %v966, 0.1
    %v968 = vadd.f32 %v956, %v967
    %v969 = vsel %vm95, %v968, 0.0
    %v970 = vrot.slane %v969, 4
    %v971 = vadd.f32 %v969, %v970
    %v972 = vrot.slane %v971, 2
    %v973 = vadd.f32 %v971, %v972
    %v974 = vrot.slane %v973, 1
    %v975 = vadd.f32 %v973, %v974
    %v976 = vmul.f32 %v975, 0.25
    %vm977 = vcmp.ge.f32.partialorder %v950, %v937
    %v978 = vsel %vm977, 1, 0
    %v979 = vcvt.s32.f32 %v978
    %v980 = vsel %vm95, %v979, 0.0
    %v981 = vrot.slane %v980, 4
    %v982 = vadd.f32 %v980, %v981
    %v983 = vrot.slane %v982, 2
    %v984 = vadd.f32 %v982, %v983
    %v985 = vrot.slane %v984, 1
    %v986 = vadd.f32 %v984, %v985
    %v987 = vmul.f32 %v986, 100.0
    %v988 = vmul.f32 %v987, 0.25
    %v989 = vmul.f32 %v976, 0.95
    %v990 = vmul.f32 %v832, 0.05
    %v991 = vadd.f32 %v989, %v990
    %v992 = vsel %vm723, %v721, 0.0
    %v993 = vrot.slane %v992, 4
    %v994 = vadd.f32 %v992, %v993
    %v995 = vrot.slane %v994, 2
    %v996 = vadd.f32 %v994, %v995
    %v997 = vrot.slane %v996, 1
    %v998 = vadd.f32 %v996, %v997
    %v999 = vrcp.pop 4.0
    %v1000 = vmul.f32 4.0, %v999
    %v1001 = vsub.f32 1.0, %v1000
    %v1002 = vmul.f32 %v999, %v1001
    %v1003 = vadd.f32 %v999, %v1002
    %vm1004 = vweird.f32 %v999
    %v1005 = vsel %vm1004, %v999, %v1003
    %v1006 = vmul.f32 %v998, %v1005
    %v1007 = vsub.f32 %v721, %v1006
    %v1008 = vmul.f32 %v1007, %v1007
    %v1009 = vsel %vm723, %v1008, 0.0
    %v1010 = vrot.slane %v1009, 4
    %v1011 = vadd.f32 %v1009, %v1010
    %v1012 = vrot.slane %v1011, 2
    %v1013 = vadd.f32 %v1011, %v1012
    %v1014 = vrot.slane %v1013, 1
    %v1015 = vadd.f32 %v1013, %v1014
    %v1016 = vrcp.pop 3.0
    %v1017 = vmul.f32 3.0, %v1016
    %v1018 = vsub.f32 1.0, %v1017
    %v1019 = vmul.f32 %v1016, %v1018
    %v1020 = vadd.f32 %v1016, %v1019
    %vm1021 = vweird.f32 %v1016
    %v1022 = vsel %vm1021, %v1016, %v1020
    %v1023 = vmul.f32 %v1015, %v1022
    %v1024 = vrsqrt.pop %v1023
    %v1025 = vmul.f32 %v1024, %v1023
    %v1026 = vmul.f32 %v1025, %v1024
    %v1027 = vmul.f32 0.5, %v1026
    %v1028 = vsub.f32 1.5, %v1027
    %v1029 = vmul.f32 %v1024, %v1028
    %v1030 = vmul.f32 %v1023, %v1029
    %vm1031 = vcmp.eq.f32.partialorder %v1023, inf
    %v1032 = vsel %vm1031, %v1023, %v1030
    %vm1033 = vcmp.eq.f32.partialorder %v1023, 0.0
    %v1034 = vand.u32 %v1023, 2147483648
    %v1035 = vsel %vm1033, %v1034, %v1032
    %v1036 = vsel %vm495, %v1035, 0.0
    %1037 = vadd.xlane.f32.xlu0 %v1036
    %v1038 = vpop.xlane.xlu0 %1037
    %v1039 = vrcp.pop 32.0
    %v1040 = vmul.f32 32.0, %v1039
    %v1041 = vsub.f32 1.0, %v1040
    %v1042 = vmul.f32 %v1039, %v1041
    %v1043 = vadd.f32 %v1039, %v1042
    %vm1044 = vweird.f32 %v1039
    %v1045 = vsel %vm1044, %v1039, %v1043
    %v1046 = vmul.f32 %v1038, %v1045
    %v1047 = vsel %vm723, %v782, 0.0
    %v1048 = vrot.slane %v1047, 4
    %v1049 = vadd.f32 %v1047, %v1048
    %v1050 = vrot.slane %v1049, 2
    %v1051 = vadd.f32 %v1049, %v1050
    %v1052 = vrot.slane %v1051, 1
    %v1053 = vadd.f32 %v1051, %v1052
    %v1054 = vmul.f32 %v1053, %v1005
    %v1055 = vsub.f32 %v721, %v1054
    %v1056 = vmul.f32 %v1055, %v1055
    %v1058 = vrot.slane %v1056, 4
    %v1060 = vsel %vm723, %v1058, 0.0
    %v1061 = vrot.slane %v1060, 4
    %v1062 = vadd.f32 %v1060, %v1061
    %v1063 = vrot.slane %v1062, 2
    %v1064 = vadd.f32 %v1062, %v1063
    %v1065 = vrot.slane %v1064, 1
    %v1066 = vadd.f32 %v1064, %v1065
    %v1067 = vmul.f32 %v1066, %v1022
    %v1068 = vrsqrt.pop %v1067
    %v1069 = vmul.f32 %v1068, %v1067
    %v1070 = vmul.f32 %v1069, %v1068
    %v1071 = vmul.f32 0.5, %v1070
    %v1072 = vsub.f32 1.5, %v1071
    %v1073 = vmul.f32 %v1068, %v1072
    %v1074 = vmul.f32 %v1067, %v1073
    %vm1075 = vcmp.eq.f32.partialorder %v1067, inf
    %v1076 = vsel %vm1075, %v1067, %v1074
    %vm1077 = vcmp.eq.f32.partialorder %v1067, 0.0
    %v1078 = vand.u32 %v1067, 2147483648
    %v1079 = vsel %vm1077, %v1078, %v1076
    %v1080 = vsel %vm495, %v1079, 0.0
    %1081 = vadd.xlane.f32.xlu0 %v1080
    %v1082 = vpop.xlane.xlu0 %1081
    %v1083 = vmul.f32 %v1082, %v1045
    %v1084 = vsel %vm723, %v722, 0.0
    %v1085 = vrot.slane %v1084, 4
    %v1086 = vadd.f32 %v1084, %v1085
    %v1087 = vrot.slane %v1086, 2
    %v1088 = vadd.f32 %v1086, %v1087
    %v1089 = vrot.slane %v1088, 1
    %v1090 = vadd.f32 %v1088, %v1089
    %v1091 = vmul.f32 %v1090, %v1005
    %v1092 = vsub.f32 %v722, %v1091
    %v1093 = vmul.f32 %v1092, %v1092
    %v1094 = vsel %vm723, %v1093, 0.0
    %v1095 = vrot.slane %v1094, 4
    %v1096 = vadd.f32 %v1094, %v1095
    %v1097 = vrot.slane %v1096, 2
    %v1098 = vadd.f32 %v1096, %v1097
    %v1099 = vrot.slane %v1098, 1
    %v1100 = vadd.f32 %v1098, %v1099
    %v1101 = vmul.f32 %v1100, %v1022
    %v1102 = vrsqrt.pop %v1101
    %v1103 = vmul.f32 %v1102, %v1101
    %v1104 = vmul.f32 %v1103, %v1102
    %v1105 = vmul.f32 0.5, %v1104
    %v1106 = vsub.f32 1.5, %v1105
    %v1107 = vmul.f32 %v1102, %v1106
    %v1108 = vmul.f32 %v1101, %v1107
    %vm1109 = vcmp.eq.f32.partialorder %v1101, inf
    %v1110 = vsel %vm1109, %v1101, %v1108
    %vm1111 = vcmp.eq.f32.partialorder %v1101, 0.0
    %v1112 = vand.u32 %v1101, 2147483648
    %v1113 = vsel %vm1111, %v1112, %v1110
    %v1114 = vsel %vm495, %v1113, 0.0
    %1115 = vadd.xlane.f32.xlu0 %v1114
    %v1116 = vpop.xlane.xlu0 %1115
    %v1117 = vmul.f32 %v1116, %v1045
    %s1118 = sld [smem:[#allocation3]]
    %v1119 = vld [vmem:[#allocation9] sm:$0xff]
    %v1120 = vld [vmem:[#allocation9 + $0x8] sm:$0xff]
    %1121 = vst.msk [vmem:[#allocation10] sm:$0xff] %vm495, %v1119
    %1122 = vst.msk [vmem:[#allocation10 + $0x8] sm:$0xff] %vm495, %v1120
    %s1123 = scalar_lea.vmem [#allocation10], %s1118
    %1124 = vst.msk [vmem:[%s1123 - $0x4] sm:$0xf0] %vm747, %v851
    %1125 = vst.msk [vmem:[%s1123 + $0x4] sm:$0xf] %vm723, %v853
    %vm1126 = vcmask 7168
    %v1127 = vsel %vm1126, %v991, %v976
    %vm1128 = vcmask 15360
    %v1129 = vsel %vm1128, %v1127, %v832
    %vm1130 = vcmask 23552
    %v1131 = vsel %vm1130, %v1129, %v780
    %vm1132 = vcmask 31744
    %v1133 = vsel %vm1132, %v1131, %v988
    %vm1134 = vcmask 39936
    %v1135 = vsel %vm1134, %v1133, %v1046
    %vm1136 = vcmask 48128
    %v1137 = vsel %vm1136, %v1135, %v1083
    %vm1138 = vcmask 56320
    %v1139 = vsel %vm1138, %v1137, %v1117
    %v1140 = vsel %vm383, %v1139, 0.0
    %1141 = vst [vmem:[#allocation14] sm:$0x1] %v1140
    // Predicated region
    $region54: #{tpu_custom_call.1} parent=1 // pred_check
      _
    $region55: #{tpu_custom_call.1} parent=1 // pred_check_branch
      %1143 = sbr.rel (0) target = $region57
    $region56: #{tpu_custom_call.1} parent=1 // pred_region
      %1145 = vsyncadd [#allocation6], 0
      %s1146 = sshll.u32 [#allocation10], 4
      %s1147 = int_to_ptr.vmem [resolvable:$true] %s1146
      %s1148 = sshll.u32 %s10, 4
      %s1149 = int_to_ptr.hbm [resolvable:$true] %s1148
      %1154 = dma.vmem_to_hbm [thread:$0]  %s1147, 256, %s1149, [#allocation6], 128, 128, 8
    $region57: #{tpu_custom_call.1} parent=1 // pred_fallthru
      _
    // Predicated region
    $region58: #{tpu_custom_call.1} parent=1 // pred_check
      _
    $region59: #{tpu_custom_call.1} parent=1 // pred_check_branch
      %1156 = sbr.rel (0) target = $region61
    $region60: #{tpu_custom_call.1} parent=1 // pred_region
      %1158 = vsyncadd [#allocation12], 0
      %s1159 = sshll.u32 [#allocation11], 4
      %s1160 = int_to_ptr.vmem [resolvable:$true] %s1159
      %s1161 = sshll.u32 %s11, 4
      %s1162 = int_to_ptr.hbm [resolvable:$true] %s1161
      %1167 = dma.vmem_to_hbm [thread:$0]  %s1160, 1024, %s1162, [#allocation12], 128, 128, 8
    $region61: #{tpu_custom_call.1} parent=1 // pred_fallthru
      _
    // Predicated region
    $region62: #{tpu_custom_call.1} parent=1 // pred_check
      _
    $region63: #{tpu_custom_call.1} parent=1 // pred_check_branch
      %1169 = sbr.rel (0) target = $region65
    $region64: #{tpu_custom_call.1} parent=1 // pred_region
      %1171 = vsyncadd [#allocation12], 0
      %s1172 = sshll.u32 [#allocation13], 4
      %s1173 = int_to_ptr.vmem [resolvable:$true] %s1172
      %s1174 = sshll.u32 %s12, 4
      %s1175 = int_to_ptr.hbm [resolvable:$true] %s1174
      %1180 = dma.vmem_to_hbm [thread:$0]  %s1173, 1024, %s1175, [#allocation12], 128, 128, 8
    $region65: #{tpu_custom_call.1} parent=1 // pred_fallthru
      _
    // Predicated region
    $region66: #{tpu_custom_call.1} parent=1 // pred_check
      _
    $region67: #{tpu_custom_call.1} parent=1 // pred_check_branch
      %1182 = sbr.rel (0) target = $region69
    $region68: #{tpu_custom_call.1} parent=1 // pred_region
      %1184 = vsyncadd [#allocation15], 0
      %s1186 = sshll.u32 [#allocation14], 4
      %s1187 = int_to_ptr.vmem [resolvable:$true] %s1186
      %s1188 = sshll.u32 %s13, 4
      %s1189 = int_to_ptr.hbm [resolvable:$true] %s1188
      %1191 = dma.vmem_to_hbm [thread:$0]  %s1187, 16, %s1189, [#allocation15]
    $region69: #{tpu_custom_call.1} parent=1 // pred_fallthru
      _
    // Predicated region
    $region70: #{tpu_custom_call.1} parent=1 // pred_check
      _
    $region71: #{tpu_custom_call.1} parent=1 // pred_check_branch
      %1193 = sbr.rel (0) target = $region73
    $region72: #{tpu_custom_call.1} parent=1 // pred_region
      %1195 = dma.done [#allocation6], 256
    $region73: #{tpu_custom_call.1} parent=1 // pred_fallthru
      _
    // Predicated region
    $region74: #{tpu_custom_call.1} parent=1 // pred_check
      _
    $region75: #{tpu_custom_call.1} parent=1 // pred_check_branch
      %1197 = sbr.rel (0) target = $region77
    $region76: #{tpu_custom_call.1} parent=1 // pred_region
      %1199 = dma.done [#allocation12], 1024
    $region77: #{tpu_custom_call.1} parent=1 // pred_fallthru
      _
    // Predicated region
    $region78: #{tpu_custom_call.1} parent=1 // pred_check
      _
    $region79: #{tpu_custom_call.1} parent=1 // pred_check_branch
      %1201 = sbr.rel (0) target = $region81
    $region80: #{tpu_custom_call.1} parent=1 // pred_region
      %1203 = dma.done [#allocation12], 1024
    $region81: #{tpu_custom_call.1} parent=1 // pred_fallthru
      _
    // Predicated region
    $region82: #{tpu_custom_call.1} parent=1 // pred_check
      _
    $region83: #{tpu_custom_call.1} parent=1 // pred_check_branch
      %1205 = sbr.rel (0) target = $region85
    $region84: #{tpu_custom_call.1} parent=1 // pred_region
      %1207 = dma.done [#allocation15], 16
    $region85: #{tpu_custom_call.1} parent=1 // pred_fallthru
      _
    %1208 = vsyncpa [#allocation5], 1
    %1209 = vsyncpa [#allocation8], 1
    %1210 = vsyncpa [#allocation6], 1
    %1211 = vsyncpa [#allocation12], 1
    %1212 = vsyncpa [#allocation15], 1

</llo_original>
